<compile_context>
chip_gen: v6e
topology: v6e:2x2x1
jax: 0.10.0
libtpu: 0.0.40
codegen_flags: <defaults>
</compile_context>

<pallas_src>
import jax
import jax.numpy as jnp
from jax import lax
from jax.experimental import pallas as pl
from jax.experimental.pallas import tpu as pltpu

FPAD = 128  # lane-dense padded width for input features / hidden sizes / classes


def gcn_edge_weight_kernel(adj_ref, norm_ref, x_ref, w_ref, b_ref, out_ref):
    """Fused 4x GraphConv(edge_weight, norm="both") + residual Linear.

    adj_ref : (N, N)          bf16  A[dst, src] = edge weight
    norm_ref: (N, 2)          f32   [:,0] = D_in^{-1/2} (dst), [:,1] = D_out^{-1/2} (src)
    x_ref   : (N, FPAD)       bf16  zero-padded input features
    w_ref   : (5, FPAD, FPAD) bf16  zero-padded [W1, W2, W3, W4, W_res]
    b_ref   : (5, 1, FPAD)    f32   zero-padded [b1, b2, b3, b4, b_res]
    out_ref : (N, FPAD)       f32   logits live in lanes [0, num_classes)
    """
    a = adj_ref[...]                       # (N, N) bf16 — stays bf16 for the MXU
    nrm = norm_ref[...]                    # (N, 2) f32
    r_in = nrm[:, 0:1]                     # (N, 1) per-dst scale
    r_out = nrm[:, 1:2]                    # (N, 1) per-src scale
    x = x_ref[...]                         # (N, FPAD) bf16
    w = w_ref[...]                         # (5, FPAD, FPAD) bf16
    b = b_ref[...]                         # (5, 1, FPAD) f32

    def conv(h_bf, layer):
        # feature transform first (cheapest FLOP order), bf16 in / f32 acc
        hw = jnp.dot(h_bf, w[layer], preferred_element_type=jnp.float32)
        # D_in^{-1/2} * (A @ (D_out^{-1/2} * (H W)))  — A_hat never materialized
        msg = (hw * r_out).astype(jnp.bfloat16)
        agg = jnp.dot(a, msg, preferred_element_type=jnp.float32)
        return agg * r_in + b[layer]

    # residual Linear(in_feats, num_classes) — no graph normalization
    res = jnp.dot(x, w[4], preferred_element_type=jnp.float32) + b[4]

    h = jnp.maximum(conv(x, 0), 0.0)
    h = jnp.maximum(conv(h.astype(jnp.bfloat16), 1), 0.0)
    h = jnp.maximum(conv(h.astype(jnp.bfloat16), 2), 0.0)
    h = conv(h.astype(jnp.bfloat16), 3)

    out_ref[...] = (h + res).astype(out_ref.dtype)


def _pad2(a, rows, cols):
    return jnp.pad(a, ((0, rows - a.shape[0]), (0, cols - a.shape[1])))


def gcn_3_layer_edge_weight(adj, x, params):
    """adj: (N, N) f32 dense weighted adjacency with A[dst, src]; x: (N, in_feats) f32."""
    (w1, b1, w2, b2, w3, b3, w4, b4, wr, br) = params
    n = x.shape[0]
    num_classes = wr.shape[1]
    assert x.shape[1] <= FPAD and num_classes <= FPAD
    assert max(w1.shape[1], w2.shape[1], w3.shape[1]) <= FPAD

    # ---- wrapper-side prep (plain XLA, fused, runs once) -------------------
    # exact f32 weighted degrees, DGL-style clamp to >= 1, "both" normalization
    r_in = lax.rsqrt(jnp.maximum(jnp.sum(adj, axis=1), 1.0))    # (N,) dst side
    r_out = lax.rsqrt(jnp.maximum(jnp.sum(adj, axis=0), 1.0))   # (N,) src side
    norm = jnp.stack([r_in, r_out], axis=1).astype(jnp.float32)  # (N, 2)

    adj_bf = adj.astype(jnp.bfloat16)
    x_bf = _pad2(x, n, FPAD).astype(jnp.bfloat16)

    w_stack = jnp.stack(
        [_pad2(w, FPAD, FPAD) for w in (w1, w2, w3, w4, wr)]
    ).astype(jnp.bfloat16)                                       # (5, FPAD, FPAD)
    b_stack = jnp.stack(
        [_pad2(b, 1, FPAD) for b in (b1, b2, b3, b4, br)]
    ).astype(jnp.float32)                                        # (5, 1, FPAD)

    vmem = pl.BlockSpec(memory_space=pltpu.MemorySpace.VMEM)
    out_pad = pl.pallas_call(
        gcn_edge_weight_kernel,
        out_shape=jax.ShapeDtypeStruct((n, FPAD), jnp.float32),
        in_specs=[vmem] * 5,
        out_specs=vmem,
        compiler_params=pltpu.CompilerParams(
            vmem_limit_bytes=32 * 1024 * 1024),
    )(adj_bf, norm, x_bf, w_stack, b_stack)

    return out_pad[:, :num_classes]


def _linear_init(key, fan_in, fan_out):
    # deterministic nn.Linear-style uniform(-1/sqrt(fan_in), 1/sqrt(fan_in))
    kw, kb = jax.random.split(key)
    bound = 1.0 / jnp.sqrt(jnp.float32(fan_in))
    w = jax.random.uniform(kw, (fan_in, fan_out), jnp.float32, -bound, bound)
    b = jax.random.uniform(kb, (1, fan_out), jnp.float32, -bound, bound)
    return w, b


if __name__ == "__main__":
    key = jax.random.PRNGKey(0)

    N = 128
    in_feats = 16
    h1_size, h2_size, h3_size = 32, 32, 32
    num_classes = 8

    (k_aw, k_am, k_x, k1, k2, k3, k4, kr) = jax.random.split(key, 8)

    # weighted, symmetric adjacency with self-loops
    raw_w = jax.random.uniform(k_aw, (N, N), jnp.float32, 0.1, 1.0)
    mask = (jax.random.uniform(k_am, (N, N)) < 0.2).astype(jnp.float32)
    adj = raw_w * mask
    adj = 0.5 * (adj + adj.T) + jnp.eye(N, dtype=jnp.float32)

    x = jax.random.normal(k_x, (N, in_feats), jnp.float32)

    w1, b1 = _linear_init(k1, in_feats, h1_size)
    w2, b2 = _linear_init(k2, h1_size, h2_size)
    w3, b3 = _linear_init(k3, h2_size, h3_size)
    w4, b4 = _linear_init(k4, h3_size, num_classes)
    wr, br = _linear_init(kr, in_feats, num_classes)
    params = (w1, b1, w2, b2, w3, b3, w4, b4, wr, br)

    out = jax.jit(gcn_3_layer_edge_weight)(adj, x, params)
    out = jax.block_until_ready(out)
    assert out.shape == (N, num_classes)

    # ---- loose check against the exact-math f32 reference ------------------
    deg_in = jnp.maximum(adj.sum(1, keepdims=True), 1.0)
    deg_out = jnp.maximum(adj.sum(0, keepdims=True), 1.0)
    a_hat = adj * lax.rsqrt(deg_in) * lax.rsqrt(deg_out)
    h = jnp.maximum(a_hat @ (x @ w1) + b1, 0.0)
    h = jnp.maximum(a_hat @ (h @ w2) + b2, 0.0)
    h = jnp.maximum(a_hat @ (h @ w3) + b3, 0.0)
    ref_f32 = a_hat @ (h @ w4) + b4 + (x @ wr + br)
    assert jnp.allclose(out, ref_f32, atol=5e-2, rtol=5e-2)

    # ---- tight check against a precision-matched (bf16 MXU) reference ------
    r_in_ref = lax.rsqrt(deg_in)           # (N, 1)
    r_out_ref = lax.rsqrt(deg_out).T       # (N, 1)
    a_bf = adj.astype(jnp.bfloat16)

    def emu_conv(hh, ww, bb):
        hw = jnp.dot(hh.astype(jnp.bfloat16), ww.astype(jnp.bfloat16),
                     preferred_element_type=jnp.float32)
        msg = (hw * r_out_ref).astype(jnp.bfloat16)
        agg = jnp.dot(a_bf, msg, preferred_element_type=jnp.float32)
        return agg * r_in_ref + bb

    res = jnp.dot(x.astype(jnp.bfloat16), wr.astype(jnp.bfloat16),
                  preferred_element_type=jnp.float32) + br
    h = jnp.maximum(emu_conv(x, w1, b1), 0.0)
    h = jnp.maximum(emu_conv(h, w2, b2), 0.0)
    h = jnp.maximum(emu_conv(h, w3, b3), 0.0)
    ref_bf = emu_conv(h, w4, b4) + res
    assert jnp.allclose(out, ref_bf, atol=1e-3, rtol=1e-3)

    print("KERNEL_OK")
</pallas_src>

<mosaic_0001>
module attributes {stable_mosaic.version = 11 : i64} {
  func.func @gcn_edge_weight_kernel(%arg0: memref<128x128xbf16, #tpu.memory_space<vmem>>, %arg1: memref<128x2xf32, #tpu.memory_space<vmem>>, %arg2: memref<128x128xbf16, #tpu.memory_space<vmem>>, %arg3: memref<5x128x128xbf16, #tpu.memory_space<vmem>>, %arg4: memref<5x1x128xf32, #tpu.memory_space<vmem>>, %arg5: memref<128x128xf32, #tpu.memory_space<vmem>>) attributes {dimension_semantics = [], scalar_prefetch = 0 : i64, scratch_operands = 0 : i64, tpu.core_type = #tpu.core_type<tc>} {
    %c0 = arith.constant 0 : index
    %c0_0 = arith.constant 0 : index
    %0 = vector.load %arg0[%c0, %c0_0] : memref<128x128xbf16, #tpu.memory_space<vmem>>, vector<128x128xbf16>
    %c0_1 = arith.constant 0 : index
    %c0_2 = arith.constant 0 : index
    %1 = vector.load %arg1[%c0_1, %c0_2] : memref<128x2xf32, #tpu.memory_space<vmem>>, vector<128x2xf32>
    %2 = vector.extract_strided_slice %1 {offsets = [0, 0], sizes = [128, 1], strides = [1, 1]} : vector<128x2xf32> to vector<128x1xf32>
    %3 = vector.extract_strided_slice %1 {offsets = [0, 1], sizes = [128, 1], strides = [1, 1]} : vector<128x2xf32> to vector<128x1xf32>
    %c0_3 = arith.constant 0 : index
    %c0_4 = arith.constant 0 : index
    %4 = vector.load %arg2[%c0_3, %c0_4] : memref<128x128xbf16, #tpu.memory_space<vmem>>, vector<128x128xbf16>
    %c0_5 = arith.constant 0 : index
    %c0_6 = arith.constant 0 : index
    %c0_7 = arith.constant 0 : index
    %5 = vector.load %arg3[%c0_5, %c0_6, %c0_7] : memref<5x128x128xbf16, #tpu.memory_space<vmem>>, vector<5x128x128xbf16>
    %c0_8 = arith.constant 0 : index
    %c0_9 = arith.constant 0 : index
    %c0_10 = arith.constant 0 : index
    %6 = vector.load %arg4[%c0_8, %c0_9, %c0_10] : memref<5x1x128xf32, #tpu.memory_space<vmem>>, vector<5x1x128xf32>
    %7 = vector.extract_strided_slice %5 {offsets = [4, 0, 0], sizes = [1, 128, 128], strides = [1, 1, 1]} : vector<5x128x128xbf16> to vector<1x128x128xbf16>
    %8 = vector.shape_cast %7 : vector<1x128x128xbf16> to vector<128x128xbf16>
    %cst = arith.constant dense<0.000000e+00> : vector<128x128xf32>
    %9 = tpu.matmul %4, %8, %cst {dimension_numbers = #tpu.dot_dimension_numbers<[1], [0], [0], [1], [0, 0, 1, 1], [], []>} : vector<128x128xbf16>, vector<128x128xbf16>, vector<128x128xf32> -> vector<128x128xf32>
    %10 = vector.extract_strided_slice %6 {offsets = [4, 0, 0], sizes = [1, 1, 128], strides = [1, 1, 1]} : vector<5x1x128xf32> to vector<1x1x128xf32>
    %11 = vector.shape_cast %10 : vector<1x1x128xf32> to vector<1x128xf32>
    %12 = vector.broadcast %11 : vector<1x128xf32> to vector<128x128xf32>
    %13 = arith.addf %9, %12 : vector<128x128xf32>
    %14 = vector.extract_strided_slice %5 {offsets = [0, 0, 0], sizes = [1, 128, 128], strides = [1, 1, 1]} : vector<5x128x128xbf16> to vector<1x128x128xbf16>
    %15 = vector.shape_cast %14 : vector<1x128x128xbf16> to vector<128x128xbf16>
    %cst_11 = arith.constant dense<0.000000e+00> : vector<128x128xf32>
    %16 = tpu.matmul %4, %15, %cst_11 {dimension_numbers = #tpu.dot_dimension_numbers<[1], [0], [0], [1], [0, 0, 1, 1], [], []>} : vector<128x128xbf16>, vector<128x128xbf16>, vector<128x128xf32> -> vector<128x128xf32>
    %17 = vector.broadcast %3 : vector<128x1xf32> to vector<128x128xf32>
    %18 = arith.mulf %16, %17 : vector<128x128xf32>
    %19 = arith.truncf %18 : vector<128x128xf32> to vector<128x128xbf16>
    %cst_12 = arith.constant dense<0.000000e+00> : vector<128x128xf32>
    %20 = tpu.matmul %0, %19, %cst_12 {dimension_numbers = #tpu.dot_dimension_numbers<[1], [0], [0], [1], [0, 0, 1, 1], [], []>} : vector<128x128xbf16>, vector<128x128xbf16>, vector<128x128xf32> -> vector<128x128xf32>
    %21 = vector.broadcast %2 : vector<128x1xf32> to vector<128x128xf32>
    %22 = arith.mulf %20, %21 : vector<128x128xf32>
    %23 = vector.extract_strided_slice %6 {offsets = [0, 0, 0], sizes = [1, 1, 128], strides = [1, 1, 1]} : vector<5x1x128xf32> to vector<1x1x128xf32>
    %24 = vector.shape_cast %23 : vector<1x1x128xf32> to vector<1x128xf32>
    %25 = vector.broadcast %24 : vector<1x128xf32> to vector<128x128xf32>
    %26 = arith.addf %22, %25 : vector<128x128xf32>
    %cst_13 = arith.constant 0.000000e+00 : f32
    %27 = vector.broadcast %cst_13 : f32 to vector<128x128xf32>
    %28 = arith.maximumf %26, %27 : vector<128x128xf32>
    %29 = arith.truncf %28 : vector<128x128xf32> to vector<128x128xbf16>
    %30 = vector.extract_strided_slice %5 {offsets = [1, 0, 0], sizes = [1, 128, 128], strides = [1, 1, 1]} : vector<5x128x128xbf16> to vector<1x128x128xbf16>
    %31 = vector.shape_cast %30 : vector<1x128x128xbf16> to vector<128x128xbf16>
    %cst_14 = arith.constant dense<0.000000e+00> : vector<128x128xf32>
    %32 = tpu.matmul %29, %31, %cst_14 {dimension_numbers = #tpu.dot_dimension_numbers<[1], [0], [0], [1], [0, 0, 1, 1], [], []>} : vector<128x128xbf16>, vector<128x128xbf16>, vector<128x128xf32> -> vector<128x128xf32>
    %33 = vector.broadcast %3 : vector<128x1xf32> to vector<128x128xf32>
    %34 = arith.mulf %32, %33 : vector<128x128xf32>
    %35 = arith.truncf %34 : vector<128x128xf32> to vector<128x128xbf16>
    %cst_15 = arith.constant dense<0.000000e+00> : vector<128x128xf32>
    %36 = tpu.matmul %0, %35, %cst_15 {dimension_numbers = #tpu.dot_dimension_numbers<[1], [0], [0], [1], [0, 0, 1, 1], [], []>} : vector<128x128xbf16>, vector<128x128xbf16>, vector<128x128xf32> -> vector<128x128xf32>
    %37 = vector.broadcast %2 : vector<128x1xf32> to vector<128x128xf32>
    %38 = arith.mulf %36, %37 : vector<128x128xf32>
    %39 = vector.extract_strided_slice %6 {offsets = [1, 0, 0], sizes = [1, 1, 128], strides = [1, 1, 1]} : vector<5x1x128xf32> to vector<1x1x128xf32>
    %40 = vector.shape_cast %39 : vector<1x1x128xf32> to vector<1x128xf32>
    %41 = vector.broadcast %40 : vector<1x128xf32> to vector<128x128xf32>
    %42 = arith.addf %38, %41 : vector<128x128xf32>
    %cst_16 = arith.constant 0.000000e+00 : f32
    %43 = vector.broadcast %cst_16 : f32 to vector<128x128xf32>
    %44 = arith.maximumf %42, %43 : vector<128x128xf32>
    %45 = arith.truncf %44 : vector<128x128xf32> to vector<128x128xbf16>
    %46 = vector.extract_strided_slice %5 {offsets = [2, 0, 0], sizes = [1, 128, 128], strides = [1, 1, 1]} : vector<5x128x128xbf16> to vector<1x128x128xbf16>
    %47 = vector.shape_cast %46 : vector<1x128x128xbf16> to vector<128x128xbf16>
    %cst_17 = arith.constant dense<0.000000e+00> : vector<128x128xf32>
    %48 = tpu.matmul %45, %47, %cst_17 {dimension_numbers = #tpu.dot_dimension_numbers<[1], [0], [0], [1], [0, 0, 1, 1], [], []>} : vector<128x128xbf16>, vector<128x128xbf16>, vector<128x128xf32> -> vector<128x128xf32>
    %49 = vector.broadcast %3 : vector<128x1xf32> to vector<128x128xf32>
    %50 = arith.mulf %48, %49 : vector<128x128xf32>
    %51 = arith.truncf %50 : vector<128x128xf32> to vector<128x128xbf16>
    %cst_18 = arith.constant dense<0.000000e+00> : vector<128x128xf32>
    %52 = tpu.matmul %0, %51, %cst_18 {dimension_numbers = #tpu.dot_dimension_numbers<[1], [0], [0], [1], [0, 0, 1, 1], [], []>} : vector<128x128xbf16>, vector<128x128xbf16>, vector<128x128xf32> -> vector<128x128xf32>
    %53 = vector.broadcast %2 : vector<128x1xf32> to vector<128x128xf32>
    %54 = arith.mulf %52, %53 : vector<128x128xf32>
    %55 = vector.extract_strided_slice %6 {offsets = [2, 0, 0], sizes = [1, 1, 128], strides = [1, 1, 1]} : vector<5x1x128xf32> to vector<1x1x128xf32>
    %56 = vector.shape_cast %55 : vector<1x1x128xf32> to vector<1x128xf32>
    %57 = vector.broadcast %56 : vector<1x128xf32> to vector<128x128xf32>
    %58 = arith.addf %54, %57 : vector<128x128xf32>
    %cst_19 = arith.constant 0.000000e+00 : f32
    %59 = vector.broadcast %cst_19 : f32 to vector<128x128xf32>
    %60 = arith.maximumf %58, %59 : vector<128x128xf32>
    %61 = arith.truncf %60 : vector<128x128xf32> to vector<128x128xbf16>
    %62 = vector.extract_strided_slice %5 {offsets = [3, 0, 0], sizes = [1, 128, 128], strides = [1, 1, 1]} : vector<5x128x128xbf16> to vector<1x128x128xbf16>
    %63 = vector.shape_cast %62 : vector<1x128x128xbf16> to vector<128x128xbf16>
    %cst_20 = arith.constant dense<0.000000e+00> : vector<128x128xf32>
    %64 = tpu.matmul %61, %63, %cst_20 {dimension_numbers = #tpu.dot_dimension_numbers<[1], [0], [0], [1], [0, 0, 1, 1], [], []>} : vector<128x128xbf16>, vector<128x128xbf16>, vector<128x128xf32> -> vector<128x128xf32>
    %65 = vector.broadcast %3 : vector<128x1xf32> to vector<128x128xf32>
    %66 = arith.mulf %64, %65 : vector<128x128xf32>
    %67 = arith.truncf %66 : vector<128x128xf32> to vector<128x128xbf16>
    %cst_21 = arith.constant dense<0.000000e+00> : vector<128x128xf32>
    %68 = tpu.matmul %0, %67, %cst_21 {dimension_numbers = #tpu.dot_dimension_numbers<[1], [0], [0], [1], [0, 0, 1, 1], [], []>} : vector<128x128xbf16>, vector<128x128xbf16>, vector<128x128xf32> -> vector<128x128xf32>
    %69 = vector.broadcast %2 : vector<128x1xf32> to vector<128x128xf32>
    %70 = arith.mulf %68, %69 : vector<128x128xf32>
    %71 = vector.extract_strided_slice %6 {offsets = [3, 0, 0], sizes = [1, 1, 128], strides = [1, 1, 1]} : vector<5x1x128xf32> to vector<1x1x128xf32>
    %72 = vector.shape_cast %71 : vector<1x1x128xf32> to vector<1x128xf32>
    %73 = vector.broadcast %72 : vector<1x128xf32> to vector<128x128xf32>
    %74 = arith.addf %70, %73 : vector<128x128xf32>
    %75 = arith.addf %74, %13 : vector<128x128xf32>
    %c0_22 = arith.constant 0 : index
    %c0_23 = arith.constant 0 : index
    %76 = vector.load %arg5[%c0_22, %c0_23] : memref<128x128xf32, #tpu.memory_space<vmem>>, vector<128x128xf32>
    tpu.vector_store %arg5[%c0_22, %c0_23], %75 {strides = array<i32>} : memref<128x128xf32, #tpu.memory_space<vmem>>, vector<128x128xf32>,
    return
  }
}

</mosaic_0001>

<llo_original>
// kernel: gcn_3_layer_edge_weight.1
$region0: #{gcn_3_layer_edge_weight.1}
  #allocation0 [shape = 'u32[]', space=smem, size = 0x4, offset = 0x4, fixed_abs, tag = 'smem constant byte address 0x4 - core index']
  #allocation1 [shape = 'u32[144,128]{1,0:T(1,128)}', space=vmem, size = 0x12000, scoped, tag = 'internal scratch']
  %s0 = inlined_call_operand.vmem [shape: bf16[128,128], index: 0, kind: input, shape index: {}]
  %s1 = inlined_call_operand.vmem [shape: f32[128,2], index: 1, kind: input, shape index: {}]
  %s2 = inlined_call_operand.vmem [shape: bf16[128,128], index: 2, kind: input, shape index: {}]
  %s3 = inlined_call_operand.vmem [shape: bf16[5,128,128], index: 3, kind: input, shape index: {}]
  %s4 = inlined_call_operand.vmem [shape: f32[5,1,128], index: 4, kind: input, shape index: {}]
  %s5 = inlined_call_operand.vmem [shape: f32[128,128], index: 5, kind: output, shape index: {}]
  %s6 = sld [smem:[#allocation0]]
  $region30: #{gcn_3_layer_edge_weight.1} parent=0
    _
  %s8 = ssub.s32 1, %s6
  %s9 = scalar_select 0, %s8, %s6
  // Predicated region
  $region2: #{gcn_3_layer_edge_weight.1} parent=0 // pred_check
    _
  $region3: #{gcn_3_layer_edge_weight.1} parent=0 // pred_check_branch
    %11 = sbr.rel (0) target = $region5
  $region4: #{gcn_3_layer_edge_weight.1} parent=0 // pred_region
    _
  $region5: #{gcn_3_layer_edge_weight.1} parent=0 // pred_fallthru
    _
  // Predicated region
  $region6: #{gcn_3_layer_edge_weight.1} parent=0 // pred_check
    _
  $region7: #{gcn_3_layer_edge_weight.1} parent=0 // pred_check_branch
    %13 = sbr.rel (0) target = $region9
  $region8: #{gcn_3_layer_edge_weight.1} parent=0 // pred_region
    _
  $region9: #{gcn_3_layer_edge_weight.1} parent=0 // pred_fallthru
    _
  // Predicated region
  $region10: #{gcn_3_layer_edge_weight.1} parent=0 // pred_check
    _
  $region11: #{gcn_3_layer_edge_weight.1} parent=0 // pred_check_branch
    %15 = sbr.rel (0) target = $region13
  $region12: #{gcn_3_layer_edge_weight.1} parent=0 // pred_region
    _
  $region13: #{gcn_3_layer_edge_weight.1} parent=0 // pred_fallthru
    _
  // Predicated region
  $region14: #{gcn_3_layer_edge_weight.1} parent=0 // pred_check
    _
  $region15: #{gcn_3_layer_edge_weight.1} parent=0 // pred_check_branch
    %17 = sbr.rel (0) target = $region17
  $region16: #{gcn_3_layer_edge_weight.1} parent=0 // pred_region
    _
  $region17: #{gcn_3_layer_edge_weight.1} parent=0 // pred_fallthru
    _
  // Predicated region
  $region18: #{gcn_3_layer_edge_weight.1} parent=0 // pred_check
    _
  $region19: #{gcn_3_layer_edge_weight.1} parent=0 // pred_check_branch
    %19 = sbr.rel (0) target = $region21
  $region20: #{gcn_3_layer_edge_weight.1} parent=0 // pred_region
    _
  $region21: #{gcn_3_layer_edge_weight.1} parent=0 // pred_fallthru
    _
  %v21 = vld [vmem:[%s0] sm:$0xf]
  %v22 = vld [vmem:[%s0 + $0x4] sm:$0xf]
  %v23 = vld [vmem:[%s0 + $0x8] sm:$0xf]
  %v24 = vld [vmem:[%s0 + $0xc] sm:$0xf]
  %v25 = vld [vmem:[%s0 + $0x10] sm:$0xf]
  %v26 = vld [vmem:[%s0 + $0x14] sm:$0xf]
  %v27 = vld [vmem:[%s0 + $0x18] sm:$0xf]
  %v28 = vld [vmem:[%s0 + $0x1c] sm:$0xf]
  %v29 = vld [vmem:[%s0 + $0x20] sm:$0xf]
  %v30 = vld [vmem:[%s0 + $0x24] sm:$0xf]
  %v31 = vld [vmem:[%s0 + $0x28] sm:$0xf]
  %v32 = vld [vmem:[%s0 + $0x2c] sm:$0xf]
  %v33 = vld [vmem:[%s0 + $0x30] sm:$0xf]
  %v34 = vld [vmem:[%s0 + $0x34] sm:$0xf]
  %v35 = vld [vmem:[%s0 + $0x38] sm:$0xf]
  %v36 = vld [vmem:[%s0 + $0x3c] sm:$0xf]
  %v37 = vld [vmem:[%s1] sm:$0xff]
  %v38 = vld [vmem:[%s1 + $0x8] sm:$0xff]
  %v39 = vld [vmem:[%s1 + $0x10] sm:$0xff]
  %v40 = vld [vmem:[%s1 + $0x18] sm:$0xff]
  %v41 = vld [vmem:[%s1 + $0x20] sm:$0xff]
  %v42 = vld [vmem:[%s1 + $0x28] sm:$0xff]
  %v43 = vld [vmem:[%s1 + $0x30] sm:$0xff]
  %v44 = vld [vmem:[%s1 + $0x38] sm:$0xff]
  %v45 = vld [vmem:[%s1 + $0x40] sm:$0xff]
  %v46 = vld [vmem:[%s1 + $0x48] sm:$0xff]
  %v47 = vld [vmem:[%s1 + $0x50] sm:$0xff]
  %v48 = vld [vmem:[%s1 + $0x58] sm:$0xff]
  %v49 = vld [vmem:[%s1 + $0x60] sm:$0xff]
  %v50 = vld [vmem:[%s1 + $0x68] sm:$0xff]
  %v51 = vld [vmem:[%s1 + $0x70] sm:$0xff]
  %v52 = vld [vmem:[%s1 + $0x78] sm:$0xff]
  %v53 = vld [vmem:[%s2] sm:$0xf]
  %v54 = vld [vmem:[%s2 + $0x4] sm:$0xf]
  %v55 = vld [vmem:[%s2 + $0x8] sm:$0xf]
  %v56 = vld [vmem:[%s2 + $0xc] sm:$0xf]
  %v57 = vld [vmem:[%s2 + $0x10] sm:$0xf]
  %v58 = vld [vmem:[%s2 + $0x14] sm:$0xf]
  %v59 = vld [vmem:[%s2 + $0x18] sm:$0xf]
  %v60 = vld [vmem:[%s2 + $0x1c] sm:$0xf]
  %v61 = vld [vmem:[%s2 + $0x20] sm:$0xf]
  %v62 = vld [vmem:[%s2 + $0x24] sm:$0xf]
  %v63 = vld [vmem:[%s2 + $0x28] sm:$0xf]
  %v64 = vld [vmem:[%s2 + $0x2c] sm:$0xf]
  %v65 = vld [vmem:[%s2 + $0x30] sm:$0xf]
  %v66 = vld [vmem:[%s2 + $0x34] sm:$0xf]
  %v67 = vld [vmem:[%s2 + $0x38] sm:$0xf]
  %v68 = vld [vmem:[%s2 + $0x3c] sm:$0xf]
  %v69 = vld [vmem:[%s3] sm:$0xf]
  %v70 = vld [vmem:[%s3 + $0x4] sm:$0xf]
  %v71 = vld [vmem:[%s3 + $0x8] sm:$0xf]
  %v72 = vld [vmem:[%s3 + $0xc] sm:$0xf]
  %v73 = vld [vmem:[%s3 + $0x10] sm:$0xf]
  %v74 = vld [vmem:[%s3 + $0x14] sm:$0xf]
  %v75 = vld [vmem:[%s3 + $0x18] sm:$0xf]
  %v76 = vld [vmem:[%s3 + $0x1c] sm:$0xf]
  %v77 = vld [vmem:[%s3 + $0x20] sm:$0xf]
  %v78 = vld [vmem:[%s3 + $0x24] sm:$0xf]
  %v79 = vld [vmem:[%s3 + $0x28] sm:$0xf]
  %v80 = vld [vmem:[%s3 + $0x2c] sm:$0xf]
  %v81 = vld [vmem:[%s3 + $0x30] sm:$0xf]
  %v82 = vld [vmem:[%s3 + $0x34] sm:$0xf]
  %v83 = vld [vmem:[%s3 + $0x38] sm:$0xf]
  %v84 = vld [vmem:[%s3 + $0x3c] sm:$0xf]
  %v85 = vld [vmem:[%s3 + $0x40] sm:$0xf]
  %v86 = vld [vmem:[%s3 + $0x44] sm:$0xf]
  %v87 = vld [vmem:[%s3 + $0x48] sm:$0xf]
  %v88 = vld [vmem:[%s3 + $0x4c] sm:$0xf]
  %v89 = vld [vmem:[%s3 + $0x50] sm:$0xf]
  %v90 = vld [vmem:[%s3 + $0x54] sm:$0xf]
  %v91 = vld [vmem:[%s3 + $0x58] sm:$0xf]
  %v92 = vld [vmem:[%s3 + $0x5c] sm:$0xf]
  %v93 = vld [vmem:[%s3 + $0x60] sm:$0xf]
  %v94 = vld [vmem:[%s3 + $0x64] sm:$0xf]
  %v95 = vld [vmem:[%s3 + $0x68] sm:$0xf]
  %v96 = vld [vmem:[%s3 + $0x6c] sm:$0xf]
  %v97 = vld [vmem:[%s3 + $0x70] sm:$0xf]
  %v98 = vld [vmem:[%s3 + $0x74] sm:$0xf]
  %v99 = vld [vmem:[%s3 + $0x78] sm:$0xf]
  %v100 = vld [vmem:[%s3 + $0x7c] sm:$0xf]
  %v101 = vld [vmem:[%s3 + $0x80] sm:$0xf]
  %v102 = vld [vmem:[%s3 + $0x84] sm:$0xf]
  %v103 = vld [vmem:[%s3 + $0x88] sm:$0xf]
  %v104 = vld [vmem:[%s3 + $0x8c] sm:$0xf]
  %v105 = vld [vmem:[%s3 + $0x90] sm:$0xf]
  %v106 = vld [vmem:[%s3 + $0x94] sm:$0xf]
  %v107 = vld [vmem:[%s3 + $0x98] sm:$0xf]
  %v108 = vld [vmem:[%s3 + $0x9c] sm:$0xf]
  %v109 = vld [vmem:[%s3 + $0xa0] sm:$0xf]
  %v110 = vld [vmem:[%s3 + $0xa4] sm:$0xf]
  %v111 = vld [vmem:[%s3 + $0xa8] sm:$0xf]
  %v112 = vld [vmem:[%s3 + $0xac] sm:$0xf]
  %v113 = vld [vmem:[%s3 + $0xb0] sm:$0xf]
  %v114 = vld [vmem:[%s3 + $0xb4] sm:$0xf]
  %v115 = vld [vmem:[%s3 + $0xb8] sm:$0xf]
  %v116 = vld [vmem:[%s3 + $0xbc] sm:$0xf]
  %v117 = vld [vmem:[%s3 + $0xc0] sm:$0xf]
  %v118 = vld [vmem:[%s3 + $0xc4] sm:$0xf]
  %v119 = vld [vmem:[%s3 + $0xc8] sm:$0xf]
  %v120 = vld [vmem:[%s3 + $0xcc] sm:$0xf]
  %v121 = vld [vmem:[%s3 + $0xd0] sm:$0xf]
  %v122 = vld [vmem:[%s3 + $0xd4] sm:$0xf]
  %v123 = vld [vmem:[%s3 + $0xd8] sm:$0xf]
  %v124 = vld [vmem:[%s3 + $0xdc] sm:$0xf]
  %v125 = vld [vmem:[%s3 + $0xe0] sm:$0xf]
  %v126 = vld [vmem:[%s3 + $0xe4] sm:$0xf]
  %v127 = vld [vmem:[%s3 + $0xe8] sm:$0xf]
  %v128 = vld [vmem:[%s3 + $0xec] sm:$0xf]
  %v129 = vld [vmem:[%s3 + $0xf0] sm:$0xf]
  %v130 = vld [vmem:[%s3 + $0xf4] sm:$0xf]
  %v131 = vld [vmem:[%s3 + $0xf8] sm:$0xf]
  %v132 = vld [vmem:[%s3 + $0xfc] sm:$0xf]
  %v133 = vld [vmem:[%s3 + $0x100] sm:$0xf]
  %v134 = vld [vmem:[%s3 + $0x104] sm:$0xf]
  %v135 = vld [vmem:[%s3 + $0x108] sm:$0xf]
  %v136 = vld [vmem:[%s3 + $0x10c] sm:$0xf]
  %v137 = vld [vmem:[%s3 + $0x110] sm:$0xf]
  %v138 = vld [vmem:[%s3 + $0x114] sm:$0xf]
  %v139 = vld [vmem:[%s3 + $0x118] sm:$0xf]
  %v140 = vld [vmem:[%s3 + $0x11c] sm:$0xf]
  %v141 = vld [vmem:[%s3 + $0x120] sm:$0xf]
  %v142 = vld [vmem:[%s3 + $0x124] sm:$0xf]
  %v143 = vld [vmem:[%s3 + $0x128] sm:$0xf]
  %v144 = vld [vmem:[%s3 + $0x12c] sm:$0xf]
  %v145 = vld [vmem:[%s3 + $0x130] sm:$0xf]
  %v146 = vld [vmem:[%s3 + $0x134] sm:$0xf]
  %v147 = vld [vmem:[%s3 + $0x138] sm:$0xf]
  %v148 = vld [vmem:[%s3 + $0x13c] sm:$0xf]
  %v149 = vld [vmem:[%s4] sm:$0x1]
  %v150 = vld [vmem:[%s4 + $0x1] sm:$0x1]
  %v151 = vld [vmem:[%s4 + $0x2] sm:$0x1]
  %v152 = vld [vmem:[%s4 + $0x3] sm:$0x1]
  %v153 = vld [vmem:[%s4 + $0x4] sm:$0x1]
  %v155 = vlaneseq
  %v156 = vshrl.u32 %v155, 7
  %v157 = vsub.s32 0, %v156
  %v158 = vrot.slane %v153, %v157
  %v176 = vunpack.c.l.b16 %v53
  %v177 = vunpack.c.l.b16 %v54
  %v178 = vunpack.c.l.b16 %v55
  %v179 = vunpack.c.l.b16 %v56
  %v180 = vunpack.c.l.b16 %v57
  %v181 = vunpack.c.l.b16 %v58
  %v182 = vunpack.c.l.b16 %v59
  %v183 = vunpack.c.l.b16 %v60
  %v184 = vunpack.c.l.b16 %v61
  %v185 = vunpack.c.l.b16 %v62
  %v186 = vunpack.c.l.b16 %v63
  %v187 = vunpack.c.l.b16 %v64
  %v188 = vunpack.c.l.b16 %v65
  %v189 = vunpack.c.l.b16 %v66
  %v190 = vunpack.c.l.b16 %v67
  %v191 = vunpack.c.l.b16 %v68
  %v192 = vpack.c.b16 %v177, %v176
  %v193 = vpack.c.b16 %v179, %v178
  %v194 = vpack.c.b16 %v181, %v180
  %v195 = vpack.c.b16 %v183, %v182
  %v196 = vpack.c.b16 %v185, %v184
  %v197 = vpack.c.b16 %v187, %v186
  %v198 = vpack.c.b16 %v189, %v188
  %v199 = vpack.c.b16 %v191, %v190
  %v224 = vunpack.c.l.b16 %v133
  %v225 = vunpack.c.l.b16 %v134
  %v226 = vunpack.c.l.b16 %v135
  %v227 = vunpack.c.l.b16 %v136
  %v228 = vunpack.c.l.b16 %v137
  %v229 = vunpack.c.l.b16 %v138
  %v230 = vunpack.c.l.b16 %v139
  %v231 = vunpack.c.l.b16 %v140
  %v232 = vunpack.c.l.b16 %v141
  %v233 = vunpack.c.l.b16 %v142
  %v234 = vunpack.c.l.b16 %v143
  %v235 = vunpack.c.l.b16 %v144
  %v236 = vunpack.c.l.b16 %v145
  %v237 = vunpack.c.l.b16 %v146
  %v238 = vunpack.c.l.b16 %v147
  %v239 = vunpack.c.l.b16 %v148
  %v240 = vpack.c.b16 %v225, %v224
  %v241 = vpack.c.b16 %v227, %v226
  %v242 = vpack.c.b16 %v229, %v228
  %v243 = vpack.c.b16 %v231, %v230
  %v244 = vpack.c.b16 %v233, %v232
  %v245 = vpack.c.b16 %v235, %v234
  %v246 = vpack.c.b16 %v237, %v236
  %v247 = vpack.c.b16 %v239, %v238
  %256 = vmatprep.subr.bf16.mxu0 0
  %257 = vmatpush1.bf16.msra.mxu0 %v247
  %258 = vmatprep.subr.bf16.mxu0 0
  %259 = vmatpush1.bf16.msra.mxu0 %v246
  %260 = vmatprep.subr.bf16.mxu0 0
  %261 = vmatpush1.bf16.msra.mxu0 %v245
  %262 = vmatprep.subr.bf16.mxu0 0
  %263 = vmatpush1.bf16.msra.mxu0 %v244
  %264 = vmatprep.subr.bf16.mxu0 0
  %265 = vmatpush1.bf16.msra.mxu0 %v243
  %266 = vmatprep.subr.bf16.mxu0 0
  %267 = vmatpush1.bf16.msra.mxu0 %v242
  %268 = vmatprep.subr.bf16.mxu0 0
  %269 = vmatpush1.bf16.msra.mxu0 %v241
  %270 = vmatprep.subr.bf16.mxu0 0
  %271 = vmatpush1.bf16.msra.mxu0 %v240
  %272 = vmatprep.subr.bf16.mxu0 0
  %273 = vmatpush2.bf16.msra.mxu0 0
  %274 = vmatprep.subr.bf16.mxu0 0
  %275 = vmatpush2.bf16.msra.mxu0 0
  %276 = vmatprep.subr.bf16.mxu0 0
  %277 = vmatpush2.bf16.msra.mxu0 0
  %278 = vmatprep.subr.bf16.mxu0 0
  %279 = vmatpush2.bf16.msra.mxu0 0
  %280 = vmatprep.subr.bf16.mxu0 0
  %281 = vmatpush2.bf16.msra.mxu0 0
  %282 = vmatprep.subr.bf16.mxu0 0
  %283 = vmatpush2.bf16.msra.mxu0 0
  %284 = vmatprep.subr.bf16.mxu0 0
  %285 = vmatpush2.bf16.msra.mxu0 0
  %286 = vmatprep.subr.bf16.mxu0 0
  %287 = vmatpush2.bf16.msra.mxu0 0
  %288 = vmatprep.mubr.bf16.mxu0 0
  %289 = vmatmul.mubr.bf16.gmra.mxu0 %v192
  %v290 = vpop.f32.mrf.mxu0
  %v291 = vadd.f32 %v158, %v290
  %v292 = vpop.f32.mrf.mxu0
  %v293 = vpop.f32.mrf.mxu0
  %v294 = vadd.f32 %v158, %v293
  %v295 = vpop.f32.mrf.mxu0
  %296 = vmatprep.mubr.bf16.mxu0 0
  %297 = vmatmul.mubr.bf16.gmra.mxu0 %v193
  %v298 = vpop.f32.mrf.mxu0
  %v299 = vadd.f32 %v158, %v298
  %v300 = vpop.f32.mrf.mxu0
  %v301 = vpop.f32.mrf.mxu0
  %v302 = vadd.f32 %v158, %v301
  %v303 = vpop.f32.mrf.mxu0
  %304 = vmatprep.mubr.bf16.mxu0 0
  %305 = vmatmul.mubr.bf16.gmra.mxu0 %v194
  %v306 = vpop.f32.mrf.mxu0
  %v307 = vadd.f32 %v158, %v306
  %v308 = vpop.f32.mrf.mxu0
  %v309 = vpop.f32.mrf.mxu0
  %v310 = vadd.f32 %v158, %v309
  %v311 = vpop.f32.mrf.mxu0
  %312 = vmatprep.mubr.bf16.mxu0 0
  %313 = vmatmul.mubr.bf16.gmra.mxu0 %v195
  %v314 = vpop.f32.mrf.mxu0
  %v315 = vadd.f32 %v158, %v314
  %v316 = vpop.f32.mrf.mxu0
  %v317 = vpop.f32.mrf.mxu0
  %v318 = vadd.f32 %v158, %v317
  %v319 = vpop.f32.mrf.mxu0
  %320 = vmatprep.mubr.bf16.mxu0 0
  %321 = vmatmul.mubr.bf16.gmra.mxu0 %v196
  %v322 = vpop.f32.mrf.mxu0
  %v323 = vadd.f32 %v158, %v322
  %v324 = vpop.f32.mrf.mxu0
  %v325 = vpop.f32.mrf.mxu0
  %v326 = vadd.f32 %v158, %v325
  %v327 = vpop.f32.mrf.mxu0
  %328 = vmatprep.mubr.bf16.mxu0 0
  %329 = vmatmul.mubr.bf16.gmra.mxu0 %v197
  %v330 = vpop.f32.mrf.mxu0
  %v331 = vadd.f32 %v158, %v330
  %v332 = vpop.f32.mrf.mxu0
  %v333 = vpop.f32.mrf.mxu0
  %v334 = vadd.f32 %v158, %v333
  %v335 = vpop.f32.mrf.mxu0
  %336 = vmatprep.mubr.bf16.mxu0 0
  %337 = vmatmul.mubr.bf16.gmra.mxu0 %v198
  %v338 = vpop.f32.mrf.mxu0
  %v339 = vadd.f32 %v158, %v338
  %v340 = vpop.f32.mrf.mxu0
  %v341 = vpop.f32.mrf.mxu0
  %v342 = vadd.f32 %v158, %v341
  %v343 = vpop.f32.mrf.mxu0
  %344 = vmatprep.mubr.bf16.mxu0 0
  %345 = vmatmul.mubr.bf16.gmra.mxu0 %v199
  %v346 = vpop.f32.mrf.mxu0
  %v347 = vadd.f32 %v158, %v346
  %v348 = vpop.f32.mrf.mxu0
  %v349 = vpop.f32.mrf.mxu0
  %v350 = vadd.f32 %v158, %v349
  %v351 = vpop.f32.mrf.mxu0
  %352 = vdwg.mxu0
  %v369 = vunpack.c.l.b16 %v69
  %v370 = vunpack.c.l.b16 %v70
  %v371 = vunpack.c.l.b16 %v71
  %v372 = vunpack.c.l.b16 %v72
  %v373 = vunpack.c.l.b16 %v73
  %v374 = vunpack.c.l.b16 %v74
  %v375 = vunpack.c.l.b16 %v75
  %v376 = vunpack.c.l.b16 %v76
  %v377 = vunpack.c.l.b16 %v77
  %v378 = vunpack.c.l.b16 %v78
  %v379 = vunpack.c.l.b16 %v79
  %v380 = vunpack.c.l.b16 %v80
  %v381 = vunpack.c.l.b16 %v81
  %v382 = vunpack.c.l.b16 %v82
  %v383 = vunpack.c.l.b16 %v83
  %v384 = vunpack.c.l.b16 %v84
  %v385 = vpack.c.b16 %v370, %v369
  %v386 = vpack.c.b16 %v372, %v371
  %v387 = vpack.c.b16 %v374, %v373
  %v388 = vpack.c.b16 %v376, %v375
  %v389 = vpack.c.b16 %v378, %v377
  %v390 = vpack.c.b16 %v380, %v379
  %v391 = vpack.c.b16 %v382, %v381
  %v392 = vpack.c.b16 %v384, %v383
  %401 = vmatprep.subr.bf16.mxu0 0
  %402 = vmatpush1.bf16.msra.mxu0 %v392
  %403 = vmatprep.subr.bf16.mxu0 0
  %404 = vmatpush1.bf16.msra.mxu0 %v391
  %405 = vmatprep.subr.bf16.mxu0 0
  %406 = vmatpush1.bf16.msra.mxu0 %v390
  %407 = vmatprep.subr.bf16.mxu0 0
  %408 = vmatpush1.bf16.msra.mxu0 %v389
  %409 = vmatprep.subr.bf16.mxu0 0
  %410 = vmatpush1.bf16.msra.mxu0 %v388
  %411 = vmatprep.subr.bf16.mxu0 0
  %412 = vmatpush1.bf16.msra.mxu0 %v387
  %413 = vmatprep.subr.bf16.mxu0 0
  %414 = vmatpush1.bf16.msra.mxu0 %v386
  %415 = vmatprep.subr.bf16.mxu0 0
  %416 = vmatpush1.bf16.msra.mxu0 %v385
  %417 = vmatprep.subr.bf16.mxu0 0
  %418 = vmatpush2.bf16.msra.mxu0 0
  %419 = vmatprep.subr.bf16.mxu0 0
  %420 = vmatpush2.bf16.msra.mxu0 0
  %421 = vmatprep.subr.bf16.mxu0 0
  %422 = vmatpush2.bf16.msra.mxu0 0
  %423 = vmatprep.subr.bf16.mxu0 0
  %424 = vmatpush2.bf16.msra.mxu0 0
  %425 = vmatprep.subr.bf16.mxu0 0
  %426 = vmatpush2.bf16.msra.mxu0 0
  %427 = vmatprep.subr.bf16.mxu0 0
  %428 = vmatpush2.bf16.msra.mxu0 0
  %429 = vmatprep.subr.bf16.mxu0 0
  %430 = vmatpush2.bf16.msra.mxu0 0
  %431 = vmatprep.subr.bf16.mxu0 0
  %432 = vmatpush2.bf16.msra.mxu0 0
  %433 = vmatprep.mubr.bf16.mxu0 0
  %434 = vmatmul.mubr.bf16.gmra.mxu0 %v192
  %v435 = vpop.f32.mrf.mxu0
  %v436 = vadd.f32 0.0, %v435
  %v437 = vpop.f32.mrf.mxu0
  %v438 = vpop.f32.mrf.mxu0
  %v439 = vadd.f32 0.0, %v438
  %v440 = vpop.f32.mrf.mxu0
  %441 = vmatprep.mubr.bf16.mxu0 0
  %442 = vmatmul.mubr.bf16.gmra.mxu0 %v193
  %v443 = vpop.f32.mrf.mxu0
  %v444 = vadd.f32 0.0, %v443
  %v445 = vpop.f32.mrf.mxu0
  %v446 = vpop.f32.mrf.mxu0
  %v447 = vadd.f32 0.0, %v446
  %v448 = vpop.f32.mrf.mxu0
  %449 = vmatprep.mubr.bf16.mxu0 0
  %450 = vmatmul.mubr.bf16.gmra.mxu0 %v194
  %v451 = vpop.f32.mrf.mxu0
  %v452 = vadd.f32 0.0, %v451
  %v453 = vpop.f32.mrf.mxu0
  %v454 = vpop.f32.mrf.mxu0
  %v455 = vadd.f32 0.0, %v454
  %v456 = vpop.f32.mrf.mxu0
  %457 = vmatprep.mubr.bf16.mxu0 0
  %458 = vmatmul.mubr.bf16.gmra.mxu0 %v195
  %v459 = vpop.f32.mrf.mxu0
  %v460 = vadd.f32 0.0, %v459
  %v461 = vpop.f32.mrf.mxu0
  %v462 = vpop.f32.mrf.mxu0
  %v463 = vadd.f32 0.0, %v462
  %v464 = vpop.f32.mrf.mxu0
  %465 = vmatprep.mubr.bf16.mxu0 0
  %466 = vmatmul.mubr.bf16.gmra.mxu0 %v196
  %v467 = vpop.f32.mrf.mxu0
  %v468 = vadd.f32 0.0, %v467
  %v469 = vpop.f32.mrf.mxu0
  %v470 = vpop.f32.mrf.mxu0
  %v471 = vadd.f32 0.0, %v470
  %v472 = vpop.f32.mrf.mxu0
  %473 = vmatprep.mubr.bf16.mxu0 0
  %474 = vmatmul.mubr.bf16.gmra.mxu0 %v197
  %v475 = vpop.f32.mrf.mxu0
  %v476 = vadd.f32 0.0, %v475
  %v477 = vpop.f32.mrf.mxu0
  %v478 = vpop.f32.mrf.mxu0
  %v479 = vadd.f32 0.0, %v478
  %v480 = vpop.f32.mrf.mxu0
  %481 = vmatprep.mubr.bf16.mxu0 0
  %482 = vmatmul.mubr.bf16.gmra.mxu0 %v198
  %v483 = vpop.f32.mrf.mxu0
  %v484 = vadd.f32 0.0, %v483
  %v485 = vpop.f32.mrf.mxu0
  %v486 = vpop.f32.mrf.mxu0
  %v487 = vadd.f32 0.0, %v486
  %v488 = vpop.f32.mrf.mxu0
  %489 = vmatprep.mubr.bf16.mxu0 0
  %490 = vmatmul.mubr.bf16.gmra.mxu0 %v199
  %v491 = vpop.f32.mrf.mxu0
  %v492 = vadd.f32 0.0, %v491
  %v493 = vpop.f32.mrf.mxu0
  %v494 = vpop.f32.mrf.mxu0
  %v495 = vadd.f32 0.0, %v494
  %v496 = vpop.f32.mrf.mxu0
  %497 = vdwg.mxu0
  %499 = vset.pattern.permute.xlu0 1
  %500 = vperm.xlu0 %499, %v37
  %v501 = vpop.permute.xlu0 %500
  %504 = vset.pattern.permute.xlu0 1
  %505 = vperm.xlu0 %504, %v38
  %v506 = vpop.permute.xlu0 %505
  %509 = vset.pattern.permute.xlu0 1
  %510 = vperm.xlu0 %509, %v39
  %v511 = vpop.permute.xlu0 %510
  %514 = vset.pattern.permute.xlu0 1
  %515 = vperm.xlu0 %514, %v40
  %v516 = vpop.permute.xlu0 %515
  %519 = vset.pattern.permute.xlu0 1
  %520 = vperm.xlu0 %519, %v41
  %v521 = vpop.permute.xlu0 %520
  %524 = vset.pattern.permute.xlu0 1
  %525 = vperm.xlu0 %524, %v42
  %v526 = vpop.permute.xlu0 %525
  %529 = vset.pattern.permute.xlu0 1
  %530 = vperm.xlu0 %529, %v43
  %v531 = vpop.permute.xlu0 %530
  %534 = vset.pattern.permute.xlu0 1
  %535 = vperm.xlu0 %534, %v44
  %v536 = vpop.permute.xlu0 %535
  %539 = vset.pattern.permute.xlu0 1
  %540 = vperm.xlu0 %539, %v45
  %v541 = vpop.permute.xlu0 %540
  %544 = vset.pattern.permute.xlu0 1
  %545 = vperm.xlu0 %544, %v46
  %v546 = vpop.permute.xlu0 %545
  %549 = vset.pattern.permute.xlu0 1
  %550 = vperm.xlu0 %549, %v47
  %v551 = vpop.permute.xlu0 %550
  %554 = vset.pattern.permute.xlu0 1
  %555 = vperm.xlu0 %554, %v48
  %v556 = vpop.permute.xlu0 %555
  %559 = vset.pattern.permute.xlu0 1
  %560 = vperm.xlu0 %559, %v49
  %v561 = vpop.permute.xlu0 %560
  %564 = vset.pattern.permute.xlu0 1
  %565 = vperm.xlu0 %564, %v50
  %v566 = vpop.permute.xlu0 %565
  %569 = vset.pattern.permute.xlu0 1
  %570 = vperm.xlu0 %569, %v51
  %v571 = vpop.permute.xlu0 %570
  %574 = vset.pattern.permute.xlu0 1
  %575 = vperm.xlu0 %574, %v52
  %v576 = vpop.permute.xlu0 %575
  %v578 = vmul.f32 %v436, %v501
  %v579 = vmul.f32 %v439, %v506
  %v580 = vmul.f32 %v444, %v511
  %v581 = vmul.f32 %v447, %v516
  %v582 = vmul.f32 %v452, %v521
  %v583 = vmul.f32 %v455, %v526
  %v584 = vmul.f32 %v460, %v531
  %v585 = vmul.f32 %v463, %v536
  %v586 = vmul.f32 %v468, %v541
  %v587 = vmul.f32 %v471, %v546
  %v588 = vmul.f32 %v476, %v551
  %v589 = vmul.f32 %v479, %v556
  %v590 = vmul.f32 %v484, %v561
  %v591 = vmul.f32 %v487, %v566
  %v592 = vmul.f32 %v492, %v571
  %v593 = vmul.f32 %v495, %v576
  %v594 = vpack.c.bf16 %v579, %v578
  %v595 = vpack.c.bf16 %v581, %v580
  %v596 = vpack.c.bf16 %v583, %v582
  %v597 = vpack.c.bf16 %v585, %v584
  %v598 = vpack.c.bf16 %v587, %v586
  %v599 = vpack.c.bf16 %v589, %v588
  %v600 = vpack.c.bf16 %v591, %v590
  %v601 = vpack.c.bf16 %v593, %v592
  %v618 = vunpack.c.l.b16 %v21
  %v619 = vunpack.c.l.b16 %v22
  %v620 = vunpack.c.l.b16 %v23
  %v621 = vunpack.c.l.b16 %v24
  %v622 = vunpack.c.l.b16 %v25
  %v623 = vunpack.c.l.b16 %v26
  %v624 = vunpack.c.l.b16 %v27
  %v625 = vunpack.c.l.b16 %v28
  %v626 = vunpack.c.l.b16 %v29
  %v627 = vunpack.c.l.b16 %v30
  %v628 = vunpack.c.l.b16 %v31
  %v629 = vunpack.c.l.b16 %v32
  %v630 = vunpack.c.l.b16 %v33
  %v631 = vunpack.c.l.b16 %v34
  %v632 = vunpack.c.l.b16 %v35
  %v633 = vunpack.c.l.b16 %v36
  %v634 = vpack.c.b16 %v619, %v618
  %v635 = vpack.c.b16 %v621, %v620
  %v636 = vpack.c.b16 %v623, %v622
  %v637 = vpack.c.b16 %v625, %v624
  %v638 = vpack.c.b16 %v627, %v626
  %v639 = vpack.c.b16 %v629, %v628
  %v640 = vpack.c.b16 %v631, %v630
  %v641 = vpack.c.b16 %v633, %v632
  %650 = vmatprep.subr.bf16.mxu0 0
  %651 = vmatpush1.bf16.msra.mxu0 %v601
  %652 = vmatprep.subr.bf16.mxu0 0
  %653 = vmatpush1.bf16.msra.mxu0 %v600
  %654 = vmatprep.subr.bf16.mxu0 0
  %655 = vmatpush1.bf16.msra.mxu0 %v599
  %656 = vmatprep.subr.bf16.mxu0 0
  %657 = vmatpush1.bf16.msra.mxu0 %v598
  %658 = vmatprep.subr.bf16.mxu0 0
  %659 = vmatpush1.bf16.msra.mxu0 %v597
  %660 = vmatprep.subr.bf16.mxu0 0
  %661 = vmatpush1.bf16.msra.mxu0 %v596
  %662 = vmatprep.subr.bf16.mxu0 0
  %663 = vmatpush1.bf16.msra.mxu0 %v595
  %664 = vmatprep.subr.bf16.mxu0 0
  %665 = vmatpush1.bf16.msra.mxu0 %v594
  %666 = vmatprep.subr.bf16.mxu0 0
  %667 = vmatpush2.bf16.msra.mxu0 0
  %668 = vmatprep.subr.bf16.mxu0 0
  %669 = vmatpush2.bf16.msra.mxu0 0
  %670 = vmatprep.subr.bf16.mxu0 0
  %671 = vmatpush2.bf16.msra.mxu0 0
  %672 = vmatprep.subr.bf16.mxu0 0
  %673 = vmatpush2.bf16.msra.mxu0 0
  %674 = vmatprep.subr.bf16.mxu0 0
  %675 = vmatpush2.bf16.msra.mxu0 0
  %676 = vmatprep.subr.bf16.mxu0 0
  %677 = vmatpush2.bf16.msra.mxu0 0
  %678 = vmatprep.subr.bf16.mxu0 0
  %679 = vmatpush2.bf16.msra.mxu0 0
  %680 = vmatprep.subr.bf16.mxu0 0
  %681 = vmatpush2.bf16.msra.mxu0 0
  %682 = vmatprep.mubr.bf16.mxu0 0
  %683 = vmatmul.mubr.bf16.gmra.mxu0 %v634
  %v684 = vpop.f32.mrf.mxu0
  %v685 = vadd.f32 0.0, %v684
  %v686 = vpop.f32.mrf.mxu0
  %v687 = vpop.f32.mrf.mxu0
  %v688 = vadd.f32 0.0, %v687
  %v689 = vpop.f32.mrf.mxu0
  %690 = vmatprep.mubr.bf16.mxu0 0
  %691 = vmatmul.mubr.bf16.gmra.mxu0 %v635
  %v692 = vpop.f32.mrf.mxu0
  %v693 = vadd.f32 0.0, %v692
  %v694 = vpop.f32.mrf.mxu0
  %v695 = vpop.f32.mrf.mxu0
  %v696 = vadd.f32 0.0, %v695
  %v697 = vpop.f32.mrf.mxu0
  %698 = vmatprep.mubr.bf16.mxu0 0
  %699 = vmatmul.mubr.bf16.gmra.mxu0 %v636
  %v700 = vpop.f32.mrf.mxu0
  %v701 = vadd.f32 0.0, %v700
  %v702 = vpop.f32.mrf.mxu0
  %v703 = vpop.f32.mrf.mxu0
  %v704 = vadd.f32 0.0, %v703
  %v705 = vpop.f32.mrf.mxu0
  %706 = vmatprep.mubr.bf16.mxu0 0
  %707 = vmatmul.mubr.bf16.gmra.mxu0 %v637
  %v708 = vpop.f32.mrf.mxu0
  %v709 = vadd.f32 0.0, %v708
  %v710 = vpop.f32.mrf.mxu0
  %v711 = vpop.f32.mrf.mxu0
  %v712 = vadd.f32 0.0, %v711
  %v713 = vpop.f32.mrf.mxu0
  %714 = vmatprep.mubr.bf16.mxu0 0
  %715 = vmatmul.mubr.bf16.gmra.mxu0 %v638
  %v716 = vpop.f32.mrf.mxu0
  %v717 = vadd.f32 0.0, %v716
  %v718 = vpop.f32.mrf.mxu0
  %v719 = vpop.f32.mrf.mxu0
  %v720 = vadd.f32 0.0, %v719
  %v721 = vpop.f32.mrf.mxu0
  %722 = vmatprep.mubr.bf16.mxu0 0
  %723 = vmatmul.mubr.bf16.gmra.mxu0 %v639
  %v724 = vpop.f32.mrf.mxu0
  %v725 = vadd.f32 0.0, %v724
  %v726 = vpop.f32.mrf.mxu0
  %v727 = vpop.f32.mrf.mxu0
  %v728 = vadd.f32 0.0, %v727
  %v729 = vpop.f32.mrf.mxu0
  %730 = vmatprep.mubr.bf16.mxu0 0
  %731 = vmatmul.mubr.bf16.gmra.mxu0 %v640
  %v732 = vpop.f32.mrf.mxu0
  %v733 = vadd.f32 0.0, %v732
  %v734 = vpop.f32.mrf.mxu0
  %v735 = vpop.f32.mrf.mxu0
  %v736 = vadd.f32 0.0, %v735
  %v737 = vpop.f32.mrf.mxu0
  %738 = vmatprep.mubr.bf16.mxu0 0
  %739 = vmatmul.mubr.bf16.gmra.mxu0 %v641
  %v740 = vpop.f32.mrf.mxu0
  %v741 = vadd.f32 0.0, %v740
  %v742 = vpop.f32.mrf.mxu0
  %v743 = vpop.f32.mrf.mxu0
  %v744 = vadd.f32 0.0, %v743
  %v745 = vpop.f32.mrf.mxu0
  %746 = vdwg.mxu0
  %747 = vset.pattern.permute.xlu0 0
  %748 = vperm.xlu0 %747, %v37
  %v749 = vpop.permute.xlu0 %748
  %751 = vset.pattern.permute.xlu0 0
  %752 = vperm.xlu0 %751, %v38
  %v753 = vpop.permute.xlu0 %752
  %755 = vset.pattern.permute.xlu0 0
  %756 = vperm.xlu0 %755, %v39
  %v757 = vpop.permute.xlu0 %756
  %759 = vset.pattern.permute.xlu0 0
  %760 = vperm.xlu0 %759, %v40
  %v761 = vpop.permute.xlu0 %760
  %763 = vset.pattern.permute.xlu0 0
  %764 = vperm.xlu0 %763, %v41
  %v765 = vpop.permute.xlu0 %764
  %767 = vset.pattern.permute.xlu0 0
  %768 = vperm.xlu0 %767, %v42
  %v769 = vpop.permute.xlu0 %768
  %771 = vset.pattern.permute.xlu0 0
  %772 = vperm.xlu0 %771, %v43
  %v773 = vpop.permute.xlu0 %772
  %775 = vset.pattern.permute.xlu0 0
  %776 = vperm.xlu0 %775, %v44
  %v777 = vpop.permute.xlu0 %776
  %779 = vset.pattern.permute.xlu0 0
  %780 = vperm.xlu0 %779, %v45
  %v781 = vpop.permute.xlu0 %780
  %783 = vset.pattern.permute.xlu0 0
  %784 = vperm.xlu0 %783, %v46
  %v785 = vpop.permute.xlu0 %784
  %787 = vset.pattern.permute.xlu0 0
  %788 = vperm.xlu0 %787, %v47
  %v789 = vpop.permute.xlu0 %788
  %791 = vset.pattern.permute.xlu0 0
  %792 = vperm.xlu0 %791, %v48
  %v793 = vpop.permute.xlu0 %792
  %795 = vset.pattern.permute.xlu0 0
  %796 = vperm.xlu0 %795, %v49
  %v797 = vpop.permute.xlu0 %796
  %799 = vset.pattern.permute.xlu0 0
  %800 = vperm.xlu0 %799, %v50
  %v801 = vpop.permute.xlu0 %800
  %803 = vset.pattern.permute.xlu0 0
  %804 = vperm.xlu0 %803, %v51
  %v805 = vpop.permute.xlu0 %804
  %807 = vset.pattern.permute.xlu0 0
  %808 = vperm.xlu0 %807, %v52
  %v809 = vpop.permute.xlu0 %808
  %v811 = vmul.f32 %v685, %v749
  %v812 = vmul.f32 %v688, %v753
  %v813 = vmul.f32 %v693, %v757
  %v814 = vmul.f32 %v696, %v761
  %v815 = vmul.f32 %v701, %v765
  %v816 = vmul.f32 %v704, %v769
  %v817 = vmul.f32 %v709, %v773
  %v818 = vmul.f32 %v712, %v777
  %v819 = vmul.f32 %v717, %v781
  %v820 = vmul.f32 %v720, %v785
  %v821 = vmul.f32 %v725, %v789
  %v822 = vmul.f32 %v728, %v793
  %v823 = vmul.f32 %v733, %v797
  %v824 = vmul.f32 %v736, %v801
  %v825 = vmul.f32 %v741, %v805
  %v826 = vmul.f32 %v744, %v809
  %v828 = vlaneseq
  %v829 = vshrl.u32 %v828, 7
  %v830 = vsub.s32 0, %v829
  %v831 = vrot.slane %v149, %v830
  %v833 = vadd.f32 %v811, %v831
  %v834 = vadd.f32 %v812, %v831
  %v835 = vadd.f32 %v813, %v831
  %v836 = vadd.f32 %v814, %v831
  %v837 = vadd.f32 %v815, %v831
  %v838 = vadd.f32 %v816, %v831
  %v839 = vadd.f32 %v817, %v831
  %v840 = vadd.f32 %v818, %v831
  %v841 = vadd.f32 %v819, %v831
  %v842 = vadd.f32 %v820, %v831
  %v843 = vadd.f32 %v821, %v831
  %v844 = vadd.f32 %v822, %v831
  %v845 = vadd.f32 %v823, %v831
  %v846 = vadd.f32 %v824, %v831
  %v847 = vadd.f32 %v825, %v831
  %v848 = vadd.f32 %v826, %v831
  %v849 = vmax.f32 %v833, 0.0
  %v850 = vmax.f32 %v834, 0.0
  %v851 = vmax.f32 %v835, 0.0
  %v852 = vmax.f32 %v836, 0.0
  %v853 = vmax.f32 %v837, 0.0
  %v854 = vmax.f32 %v838, 0.0
  %v855 = vmax.f32 %v839, 0.0
  %v856 = vmax.f32 %v840, 0.0
  %v857 = vmax.f32 %v841, 0.0
  %v858 = vmax.f32 %v842, 0.0
  %v859 = vmax.f32 %v843, 0.0
  %v860 = vmax.f32 %v844, 0.0
  %v861 = vmax.f32 %v845, 0.0
  %v862 = vmax.f32 %v846, 0.0
  %v863 = vmax.f32 %v847, 0.0
  %v864 = vmax.f32 %v848, 0.0
  %v865 = vpack.c.bf16 %v850, %v849
  %v866 = vpack.c.bf16 %v852, %v851
  %v867 = vpack.c.bf16 %v854, %v853
  %v868 = vpack.c.bf16 %v856, %v855
  %v869 = vpack.c.bf16 %v858, %v857
  %v870 = vpack.c.bf16 %v860, %v859
  %v871 = vpack.c.bf16 %v862, %v861
  %v872 = vpack.c.bf16 %v864, %v863
  %v889 = vunpack.c.l.b16 %v85
  %v890 = vunpack.c.l.b16 %v86
  %v891 = vunpack.c.l.b16 %v87
  %v892 = vunpack.c.l.b16 %v88
  %v893 = vunpack.c.l.b16 %v89
  %v894 = vunpack.c.l.b16 %v90
  %v895 = vunpack.c.l.b16 %v91
  %v896 = vunpack.c.l.b16 %v92
  %v897 = vunpack.c.l.b16 %v93
  %v898 = vunpack.c.l.b16 %v94
  %v899 = vunpack.c.l.b16 %v95
  %v900 = vunpack.c.l.b16 %v96
  %v901 = vunpack.c.l.b16 %v97
  %v902 = vunpack.c.l.b16 %v98
  %v903 = vunpack.c.l.b16 %v99
  %v904 = vunpack.c.l.b16 %v100
  %v905 = vpack.c.b16 %v890, %v889
  %v906 = vpack.c.b16 %v892, %v891
  %v907 = vpack.c.b16 %v894, %v893
  %v908 = vpack.c.b16 %v896, %v895
  %v909 = vpack.c.b16 %v898, %v897
  %v910 = vpack.c.b16 %v900, %v899
  %v911 = vpack.c.b16 %v902, %v901
  %v912 = vpack.c.b16 %v904, %v903
  %921 = vmatprep.subr.bf16.mxu0 0
  %922 = vmatpush1.bf16.msra.mxu0 %v912
  %923 = vmatprep.subr.bf16.mxu0 0
  %924 = vmatpush1.bf16.msra.mxu0 %v911
  %925 = vmatprep.subr.bf16.mxu0 0
  %926 = vmatpush1.bf16.msra.mxu0 %v910
  %927 = vmatprep.subr.bf16.mxu0 0
  %928 = vmatpush1.bf16.msra.mxu0 %v909
  %929 = vmatprep.subr.bf16.mxu0 0
  %930 = vmatpush1.bf16.msra.mxu0 %v908
  %931 = vmatprep.subr.bf16.mxu0 0
  %932 = vmatpush1.bf16.msra.mxu0 %v907
  %933 = vmatprep.subr.bf16.mxu0 0
  %934 = vmatpush1.bf16.msra.mxu0 %v906
  %935 = vmatprep.subr.bf16.mxu0 0
  %936 = vmatpush1.bf16.msra.mxu0 %v905
  %937 = vmatprep.subr.bf16.mxu0 0
  %938 = vmatpush2.bf16.msra.mxu0 0
  %939 = vmatprep.subr.bf16.mxu0 0
  %940 = vmatpush2.bf16.msra.mxu0 0
  %941 = vmatprep.subr.bf16.mxu0 0
  %942 = vmatpush2.bf16.msra.mxu0 0
  %943 = vmatprep.subr.bf16.mxu0 0
  %944 = vmatpush2.bf16.msra.mxu0 0
  %945 = vmatprep.subr.bf16.mxu0 0
  %946 = vmatpush2.bf16.msra.mxu0 0
  %947 = vmatprep.subr.bf16.mxu0 0
  %948 = vmatpush2.bf16.msra.mxu0 0
  %949 = vmatprep.subr.bf16.mxu0 0
  %950 = vmatpush2.bf16.msra.mxu0 0
  %951 = vmatprep.subr.bf16.mxu0 0
  %952 = vmatpush2.bf16.msra.mxu0 0
  %953 = vmatprep.mubr.bf16.mxu0 0
  %954 = vmatmul.mubr.bf16.gmra.mxu0 %v865
  %v955 = vpop.f32.mrf.mxu0
  %v956 = vadd.f32 0.0, %v955
  %v957 = vpop.f32.mrf.mxu0
  %v958 = vpop.f32.mrf.mxu0
  %v959 = vadd.f32 0.0, %v958
  %v960 = vpop.f32.mrf.mxu0
  %961 = vmatprep.mubr.bf16.mxu0 0
  %962 = vmatmul.mubr.bf16.gmra.mxu0 %v866
  %v963 = vpop.f32.mrf.mxu0
  %v964 = vadd.f32 0.0, %v963
  %v965 = vpop.f32.mrf.mxu0
  %v966 = vpop.f32.mrf.mxu0
  %v967 = vadd.f32 0.0, %v966
  %v968 = vpop.f32.mrf.mxu0
  %969 = vmatprep.mubr.bf16.mxu0 0
  %970 = vmatmul.mubr.bf16.gmra.mxu0 %v867
  %v971 = vpop.f32.mrf.mxu0
  %v972 = vadd.f32 0.0, %v971
  %v973 = vpop.f32.mrf.mxu0
  %v974 = vpop.f32.mrf.mxu0
  %v975 = vadd.f32 0.0, %v974
  %v976 = vpop.f32.mrf.mxu0
  %977 = vmatprep.mubr.bf16.mxu0 0
  %978 = vmatmul.mubr.bf16.gmra.mxu0 %v868
  %v979 = vpop.f32.mrf.mxu0
  %v980 = vadd.f32 0.0, %v979
  %v981 = vpop.f32.mrf.mxu0
  %v982 = vpop.f32.mrf.mxu0
  %v983 = vadd.f32 0.0, %v982
  %v984 = vpop.f32.mrf.mxu0
  %985 = vmatprep.mubr.bf16.mxu0 0
  %986 = vmatmul.mubr.bf16.gmra.mxu0 %v869
  %v987 = vpop.f32.mrf.mxu0
  %v988 = vadd.f32 0.0, %v987
  %v989 = vpop.f32.mrf.mxu0
  %v990 = vpop.f32.mrf.mxu0
  %v991 = vadd.f32 0.0, %v990
  %v992 = vpop.f32.mrf.mxu0
  %993 = vmatprep.mubr.bf16.mxu0 0
  %994 = vmatmul.mubr.bf16.gmra.mxu0 %v870
  %v995 = vpop.f32.mrf.mxu0
  %v996 = vadd.f32 0.0, %v995
  %v997 = vpop.f32.mrf.mxu0
  %v998 = vpop.f32.mrf.mxu0
  %v999 = vadd.f32 0.0, %v998
  %v1000 = vpop.f32.mrf.mxu0
  %1001 = vmatprep.mubr.bf16.mxu0 0
  %1002 = vmatmul.mubr.bf16.gmra.mxu0 %v871
  %v1003 = vpop.f32.mrf.mxu0
  %v1004 = vadd.f32 0.0, %v1003
  %v1005 = vpop.f32.mrf.mxu0
  %v1006 = vpop.f32.mrf.mxu0
  %v1007 = vadd.f32 0.0, %v1006
  %v1008 = vpop.f32.mrf.mxu0
  %1009 = vmatprep.mubr.bf16.mxu0 0
  %1010 = vmatmul.mubr.bf16.gmra.mxu0 %v872
  %v1011 = vpop.f32.mrf.mxu0
  %v1012 = vadd.f32 0.0, %v1011
  %v1013 = vpop.f32.mrf.mxu0
  %v1014 = vpop.f32.mrf.mxu0
  %v1015 = vadd.f32 0.0, %v1014
  %v1016 = vpop.f32.mrf.mxu0
  %1017 = vdwg.mxu0
  %v1018 = vmul.f32 %v956, %v501
  %v1019 = vmul.f32 %v959, %v506
  %v1020 = vmul.f32 %v964, %v511
  %v1021 = vmul.f32 %v967, %v516
  %v1022 = vmul.f32 %v972, %v521
  %v1023 = vmul.f32 %v975, %v526
  %v1024 = vmul.f32 %v980, %v531
  %v1025 = vmul.f32 %v983, %v536
  %v1026 = vmul.f32 %v988, %v541
  %v1027 = vmul.f32 %v991, %v546
  %v1028 = vmul.f32 %v996, %v551
  %v1029 = vmul.f32 %v999, %v556
  %v1030 = vmul.f32 %v1004, %v561
  %v1031 = vmul.f32 %v1007, %v566
  %v1032 = vmul.f32 %v1012, %v571
  %v1033 = vmul.f32 %v1015, %v576
  %v1034 = vpack.c.bf16 %v1019, %v1018
  %v1035 = vpack.c.bf16 %v1021, %v1020
  %v1036 = vpack.c.bf16 %v1023, %v1022
  %v1037 = vpack.c.bf16 %v1025, %v1024
  %v1038 = vpack.c.bf16 %v1027, %v1026
  %v1039 = vpack.c.bf16 %v1029, %v1028
  %v1040 = vpack.c.bf16 %v1031, %v1030
  %v1041 = vpack.c.bf16 %v1033, %v1032
  %1042 = vmatprep.subr.bf16.mxu0 0
  %1043 = vmatpush1.bf16.msra.mxu0 %v1041
  %1044 = vmatprep.subr.bf16.mxu0 0
  %1045 = vmatpush1.bf16.msra.mxu0 %v1040
  %1046 = vmatprep.subr.bf16.mxu0 0
  %1047 = vmatpush1.bf16.msra.mxu0 %v1039
  %1048 = vmatprep.subr.bf16.mxu0 0
  %1049 = vmatpush1.bf16.msra.mxu0 %v1038
  %1050 = vmatprep.subr.bf16.mxu0 0
  %1051 = vmatpush1.bf16.msra.mxu0 %v1037
  %1052 = vmatprep.subr.bf16.mxu0 0
  %1053 = vmatpush1.bf16.msra.mxu0 %v1036
  %1054 = vmatprep.subr.bf16.mxu0 0
  %1055 = vmatpush1.bf16.msra.mxu0 %v1035
  %1056 = vmatprep.subr.bf16.mxu0 0
  %1057 = vmatpush1.bf16.msra.mxu0 %v1034
  %1058 = vmatprep.subr.bf16.mxu0 0
  %1059 = vmatpush2.bf16.msra.mxu0 0
  %1060 = vmatprep.subr.bf16.mxu0 0
  %1061 = vmatpush2.bf16.msra.mxu0 0
  %1062 = vmatprep.subr.bf16.mxu0 0
  %1063 = vmatpush2.bf16.msra.mxu0 0
  %1064 = vmatprep.subr.bf16.mxu0 0
  %1065 = vmatpush2.bf16.msra.mxu0 0
  %1066 = vmatprep.subr.bf16.mxu0 0
  %1067 = vmatpush2.bf16.msra.mxu0 0
  %1068 = vmatprep.subr.bf16.mxu0 0
  %1069 = vmatpush2.bf16.msra.mxu0 0
  %1070 = vmatprep.subr.bf16.mxu0 0
  %1071 = vmatpush2.bf16.msra.mxu0 0
  %1072 = vmatprep.subr.bf16.mxu0 0
  %1073 = vmatpush2.bf16.msra.mxu0 0
  %1074 = vmatprep.mubr.bf16.mxu0 0
  %1075 = vmatmul.mubr.bf16.gmra.mxu0 %v634
  %v1076 = vpop.f32.mrf.mxu0
  %v1077 = vadd.f32 0.0, %v1076
  %v1078 = vpop.f32.mrf.mxu0
  %v1079 = vpop.f32.mrf.mxu0
  %v1080 = vadd.f32 0.0, %v1079
  %v1081 = vpop.f32.mrf.mxu0
  %1082 = vmatprep.mubr.bf16.mxu0 0
  %1083 = vmatmul.mubr.bf16.gmra.mxu0 %v635
  %v1084 = vpop.f32.mrf.mxu0
  %v1085 = vadd.f32 0.0, %v1084
  %v1086 = vpop.f32.mrf.mxu0
  %v1087 = vpop.f32.mrf.mxu0
  %v1088 = vadd.f32 0.0, %v1087
  %v1089 = vpop.f32.mrf.mxu0
  %1090 = vmatprep.mubr.bf16.mxu0 0
  %1091 = vmatmul.mubr.bf16.gmra.mxu0 %v636
  %v1092 = vpop.f32.mrf.mxu0
  %v1093 = vadd.f32 0.0, %v1092
  %v1094 = vpop.f32.mrf.mxu0
  %v1095 = vpop.f32.mrf.mxu0
  %v1096 = vadd.f32 0.0, %v1095
  %v1097 = vpop.f32.mrf.mxu0
  %1098 = vmatprep.mubr.bf16.mxu0 0
  %1099 = vmatmul.mubr.bf16.gmra.mxu0 %v637
  %v1100 = vpop.f32.mrf.mxu0
  %v1101 = vadd.f32 0.0, %v1100
  %v1102 = vpop.f32.mrf.mxu0
  %v1103 = vpop.f32.mrf.mxu0
  %v1104 = vadd.f32 0.0, %v1103
  %v1105 = vpop.f32.mrf.mxu0
  %1106 = vmatprep.mubr.bf16.mxu0 0
  %1107 = vmatmul.mubr.bf16.gmra.mxu0 %v638
  %v1108 = vpop.f32.mrf.mxu0
  %v1109 = vadd.f32 0.0, %v1108
  %v1110 = vpop.f32.mrf.mxu0
  %v1111 = vpop.f32.mrf.mxu0
  %v1112 = vadd.f32 0.0, %v1111
  %v1113 = vpop.f32.mrf.mxu0
  %1114 = vmatprep.mubr.bf16.mxu0 0
  %1115 = vmatmul.mubr.bf16.gmra.mxu0 %v639
  %v1116 = vpop.f32.mrf.mxu0
  %v1117 = vadd.f32 0.0, %v1116
  %v1118 = vpop.f32.mrf.mxu0
  %v1119 = vpop.f32.mrf.mxu0
  %v1120 = vadd.f32 0.0, %v1119
  %v1121 = vpop.f32.mrf.mxu0
  %1122 = vmatprep.mubr.bf16.mxu0 0
  %1123 = vmatmul.mubr.bf16.gmra.mxu0 %v640
  %v1124 = vpop.f32.mrf.mxu0
  %v1125 = vadd.f32 0.0, %v1124
  %v1126 = vpop.f32.mrf.mxu0
  %v1127 = vpop.f32.mrf.mxu0
  %v1128 = vadd.f32 0.0, %v1127
  %v1129 = vpop.f32.mrf.mxu0
  %1130 = vmatprep.mubr.bf16.mxu0 0
  %1131 = vmatmul.mubr.bf16.gmra.mxu0 %v641
  %v1132 = vpop.f32.mrf.mxu0
  %v1133 = vadd.f32 0.0, %v1132
  %v1134 = vpop.f32.mrf.mxu0
  %v1135 = vpop.f32.mrf.mxu0
  %v1136 = vadd.f32 0.0, %v1135
  %v1137 = vpop.f32.mrf.mxu0
  %1138 = vdwg.mxu0
  %v1139 = vmul.f32 %v1077, %v749
  %v1140 = vmul.f32 %v1080, %v753
  %v1141 = vmul.f32 %v1085, %v757
  %v1142 = vmul.f32 %v1088, %v761
  %v1143 = vmul.f32 %v1093, %v765
  %v1144 = vmul.f32 %v1096, %v769
  %v1145 = vmul.f32 %v1101, %v773
  %v1146 = vmul.f32 %v1104, %v777
  %v1147 = vmul.f32 %v1109, %v781
  %v1148 = vmul.f32 %v1112, %v785
  %v1149 = vmul.f32 %v1117, %v789
  %v1150 = vmul.f32 %v1120, %v793
  %v1151 = vmul.f32 %v1125, %v797
  %v1152 = vmul.f32 %v1128, %v801
  %v1153 = vmul.f32 %v1133, %v805
  %v1154 = vmul.f32 %v1136, %v809
  %v1156 = vlaneseq
  %v1157 = vshrl.u32 %v1156, 7
  %v1158 = vsub.s32 0, %v1157
  %v1159 = vrot.slane %v150, %v1158
  %v1161 = vadd.f32 %v1139, %v1159
  %v1162 = vadd.f32 %v1140, %v1159
  %v1163 = vadd.f32 %v1141, %v1159
  %v1164 = vadd.f32 %v1142, %v1159
  %v1165 = vadd.f32 %v1143, %v1159
  %v1166 = vadd.f32 %v1144, %v1159
  %v1167 = vadd.f32 %v1145, %v1159
  %v1168 = vadd.f32 %v1146, %v1159
  %v1169 = vadd.f32 %v1147, %v1159
  %v1170 = vadd.f32 %v1148, %v1159
  %v1171 = vadd.f32 %v1149, %v1159
  %v1172 = vadd.f32 %v1150, %v1159
  %v1173 = vadd.f32 %v1151, %v1159
  %v1174 = vadd.f32 %v1152, %v1159
  %v1175 = vadd.f32 %v1153, %v1159
  %v1176 = vadd.f32 %v1154, %v1159
  %v1177 = vmax.f32 %v1161, 0.0
  %v1178 = vmax.f32 %v1162, 0.0
  %v1179 = vmax.f32 %v1163, 0.0
  %v1180 = vmax.f32 %v1164, 0.0
  %v1181 = vmax.f32 %v1165, 0.0
  %v1182 = vmax.f32 %v1166, 0.0
  %v1183 = vmax.f32 %v1167, 0.0
  %v1184 = vmax.f32 %v1168, 0.0
  %v1185 = vmax.f32 %v1169, 0.0
  %v1186 = vmax.f32 %v1170, 0.0
  %v1187 = vmax.f32 %v1171, 0.0
  %v1188 = vmax.f32 %v1172, 0.0
  %v1189 = vmax.f32 %v1173, 0.0
  %v1190 = vmax.f32 %v1174, 0.0
  %v1191 = vmax.f32 %v1175, 0.0
  %v1192 = vmax.f32 %v1176, 0.0
  %v1193 = vpack.c.bf16 %v1178, %v1177
  %v1194 = vpack.c.bf16 %v1180, %v1179
  %v1195 = vpack.c.bf16 %v1182, %v1181
  %v1196 = vpack.c.bf16 %v1184, %v1183
  %v1197 = vpack.c.bf16 %v1186, %v1185
  %v1198 = vpack.c.bf16 %v1188, %v1187
  %v1199 = vpack.c.bf16 %v1190, %v1189
  %v1200 = vpack.c.bf16 %v1192, %v1191
  %v1217 = vunpack.c.l.b16 %v101
  %v1218 = vunpack.c.l.b16 %v102
  %v1219 = vunpack.c.l.b16 %v103
  %v1220 = vunpack.c.l.b16 %v104
  %v1221 = vunpack.c.l.b16 %v105
  %v1222 = vunpack.c.l.b16 %v106
  %v1223 = vunpack.c.l.b16 %v107
  %v1224 = vunpack.c.l.b16 %v108
  %v1225 = vunpack.c.l.b16 %v109
  %v1226 = vunpack.c.l.b16 %v110
  %v1227 = vunpack.c.l.b16 %v111
  %v1228 = vunpack.c.l.b16 %v112
  %v1229 = vunpack.c.l.b16 %v113
  %v1230 = vunpack.c.l.b16 %v114
  %v1231 = vunpack.c.l.b16 %v115
  %v1232 = vunpack.c.l.b16 %v116
  %v1233 = vpack.c.b16 %v1218, %v1217
  %v1234 = vpack.c.b16 %v1220, %v1219
  %v1235 = vpack.c.b16 %v1222, %v1221
  %v1236 = vpack.c.b16 %v1224, %v1223
  %v1237 = vpack.c.b16 %v1226, %v1225
  %v1238 = vpack.c.b16 %v1228, %v1227
  %v1239 = vpack.c.b16 %v1230, %v1229
  %v1240 = vpack.c.b16 %v1232, %v1231
  %1249 = vmatprep.subr.bf16.mxu0 0
  %1250 = vmatpush1.bf16.msra.mxu0 %v1240
  %1251 = vmatprep.subr.bf16.mxu0 0
  %1252 = vmatpush1.bf16.msra.mxu0 %v1239
  %1253 = vmatprep.subr.bf16.mxu0 0
  %1254 = vmatpush1.bf16.msra.mxu0 %v1238
  %1255 = vmatprep.subr.bf16.mxu0 0
  %1256 = vmatpush1.bf16.msra.mxu0 %v1237
  %1257 = vmatprep.subr.bf16.mxu0 0
  %1258 = vmatpush1.bf16.msra.mxu0 %v1236
  %1259 = vmatprep.subr.bf16.mxu0 0
  %1260 = vmatpush1.bf16.msra.mxu0 %v1235
  %1261 = vmatprep.subr.bf16.mxu0 0
  %1262 = vmatpush1.bf16.msra.mxu0 %v1234
  %1263 = vmatprep.subr.bf16.mxu0 0
  %1264 = vmatpush1.bf16.msra.mxu0 %v1233
  %1265 = vmatprep.subr.bf16.mxu0 0
  %1266 = vmatpush2.bf16.msra.mxu0 0
  %1267 = vmatprep.subr.bf16.mxu0 0
  %1268 = vmatpush2.bf16.msra.mxu0 0
  %1269 = vmatprep.subr.bf16.mxu0 0
  %1270 = vmatpush2.bf16.msra.mxu0 0
  %1271 = vmatprep.subr.bf16.mxu0 0
  %1272 = vmatpush2.bf16.msra.mxu0 0
  %1273 = vmatprep.subr.bf16.mxu0 0
  %1274 = vmatpush2.bf16.msra.mxu0 0
  %1275 = vmatprep.subr.bf16.mxu0 0
  %1276 = vmatpush2.bf16.msra.mxu0 0
  %1277 = vmatprep.subr.bf16.mxu0 0
  %1278 = vmatpush2.bf16.msra.mxu0 0
  %1279 = vmatprep.subr.bf16.mxu0 0
  %1280 = vmatpush2.bf16.msra.mxu0 0
  %1281 = vmatprep.mubr.bf16.mxu0 0
  %1282 = vmatmul.mubr.bf16.gmra.mxu0 %v1193
  %v1283 = vpop.f32.mrf.mxu0
  %v1284 = vadd.f32 0.0, %v1283
  %v1285 = vpop.f32.mrf.mxu0
  %v1286 = vpop.f32.mrf.mxu0
  %v1287 = vadd.f32 0.0, %v1286
  %v1288 = vpop.f32.mrf.mxu0
  %1289 = vmatprep.mubr.bf16.mxu0 0
  %1290 = vmatmul.mubr.bf16.gmra.mxu0 %v1194
  %v1291 = vpop.f32.mrf.mxu0
  %v1292 = vadd.f32 0.0, %v1291
  %v1293 = vpop.f32.mrf.mxu0
  %v1294 = vpop.f32.mrf.mxu0
  %v1295 = vadd.f32 0.0, %v1294
  %v1296 = vpop.f32.mrf.mxu0
  %1297 = vmatprep.mubr.bf16.mxu0 0
  %1298 = vmatmul.mubr.bf16.gmra.mxu0 %v1195
  %v1299 = vpop.f32.mrf.mxu0
  %v1300 = vadd.f32 0.0, %v1299
  %v1301 = vpop.f32.mrf.mxu0
  %v1302 = vpop.f32.mrf.mxu0
  %v1303 = vadd.f32 0.0, %v1302
  %v1304 = vpop.f32.mrf.mxu0
  %1305 = vmatprep.mubr.bf16.mxu0 0
  %1306 = vmatmul.mubr.bf16.gmra.mxu0 %v1196
  %v1307 = vpop.f32.mrf.mxu0
  %v1308 = vadd.f32 0.0, %v1307
  %v1309 = vpop.f32.mrf.mxu0
  %v1310 = vpop.f32.mrf.mxu0
  %v1311 = vadd.f32 0.0, %v1310
  %v1312 = vpop.f32.mrf.mxu0
  %1313 = vmatprep.mubr.bf16.mxu0 0
  %1314 = vmatmul.mubr.bf16.gmra.mxu0 %v1197
  %v1315 = vpop.f32.mrf.mxu0
  %v1316 = vadd.f32 0.0, %v1315
  %v1317 = vpop.f32.mrf.mxu0
  %v1318 = vpop.f32.mrf.mxu0
  %v1319 = vadd.f32 0.0, %v1318
  %v1320 = vpop.f32.mrf.mxu0
  %1321 = vmatprep.mubr.bf16.mxu0 0
  %1322 = vmatmul.mubr.bf16.gmra.mxu0 %v1198
  %v1323 = vpop.f32.mrf.mxu0
  %v1324 = vadd.f32 0.0, %v1323
  %v1325 = vpop.f32.mrf.mxu0
  %v1326 = vpop.f32.mrf.mxu0
  %v1327 = vadd.f32 0.0, %v1326
  %v1328 = vpop.f32.mrf.mxu0
  %1329 = vmatprep.mubr.bf16.mxu0 0
  %1330 = vmatmul.mubr.bf16.gmra.mxu0 %v1199
  %v1331 = vpop.f32.mrf.mxu0
  %v1332 = vadd.f32 0.0, %v1331
  %v1333 = vpop.f32.mrf.mxu0
  %v1334 = vpop.f32.mrf.mxu0
  %v1335 = vadd.f32 0.0, %v1334
  %v1336 = vpop.f32.mrf.mxu0
  %1337 = vmatprep.mubr.bf16.mxu0 0
  %1338 = vmatmul.mubr.bf16.gmra.mxu0 %v1200
  %v1339 = vpop.f32.mrf.mxu0
  %v1340 = vadd.f32 0.0, %v1339
  %v1341 = vpop.f32.mrf.mxu0
  %v1342 = vpop.f32.mrf.mxu0
  %v1343 = vadd.f32 0.0, %v1342
  %v1344 = vpop.f32.mrf.mxu0
  %1345 = vdwg.mxu0
  %v1346 = vmul.f32 %v1284, %v501
  %v1347 = vmul.f32 %v1287, %v506
  %v1348 = vmul.f32 %v1292, %v511
  %v1349 = vmul.f32 %v1295, %v516
  %v1350 = vmul.f32 %v1300, %v521
  %v1351 = vmul.f32 %v1303, %v526
  %v1352 = vmul.f32 %v1308, %v531
  %v1353 = vmul.f32 %v1311, %v536
  %v1354 = vmul.f32 %v1316, %v541
  %v1355 = vmul.f32 %v1319, %v546
  %v1356 = vmul.f32 %v1324, %v551
  %v1357 = vmul.f32 %v1327, %v556
  %v1358 = vmul.f32 %v1332, %v561
  %v1359 = vmul.f32 %v1335, %v566
  %v1360 = vmul.f32 %v1340, %v571
  %v1361 = vmul.f32 %v1343, %v576
  %v1362 = vpack.c.bf16 %v1347, %v1346
  %v1363 = vpack.c.bf16 %v1349, %v1348
  %v1364 = vpack.c.bf16 %v1351, %v1350
  %v1365 = vpack.c.bf16 %v1353, %v1352
  %v1366 = vpack.c.bf16 %v1355, %v1354
  %v1367 = vpack.c.bf16 %v1357, %v1356
  %v1368 = vpack.c.bf16 %v1359, %v1358
  %v1369 = vpack.c.bf16 %v1361, %v1360
  %1370 = vmatprep.subr.bf16.mxu0 0
  %1371 = vmatpush1.bf16.msra.mxu0 %v1369
  %1372 = vmatprep.subr.bf16.mxu0 0
  %1373 = vmatpush1.bf16.msra.mxu0 %v1368
  %1374 = vmatprep.subr.bf16.mxu0 0
  %1375 = vmatpush1.bf16.msra.mxu0 %v1367
  %1376 = vmatprep.subr.bf16.mxu0 0
  %1377 = vmatpush1.bf16.msra.mxu0 %v1366
  %1378 = vmatprep.subr.bf16.mxu0 0
  %1379 = vmatpush1.bf16.msra.mxu0 %v1365
  %1380 = vmatprep.subr.bf16.mxu0 0
  %1381 = vmatpush1.bf16.msra.mxu0 %v1364
  %1382 = vmatprep.subr.bf16.mxu0 0
  %1383 = vmatpush1.bf16.msra.mxu0 %v1363
  %1384 = vmatprep.subr.bf16.mxu0 0
  %1385 = vmatpush1.bf16.msra.mxu0 %v1362
  %1386 = vmatprep.subr.bf16.mxu0 0
  %1387 = vmatpush2.bf16.msra.mxu0 0
  %1388 = vmatprep.subr.bf16.mxu0 0
  %1389 = vmatpush2.bf16.msra.mxu0 0
  %1390 = vmatprep.subr.bf16.mxu0 0
  %1391 = vmatpush2.bf16.msra.mxu0 0
  %1392 = vmatprep.subr.bf16.mxu0 0
  %1393 = vmatpush2.bf16.msra.mxu0 0
  %1394 = vmatprep.subr.bf16.mxu0 0
  %1395 = vmatpush2.bf16.msra.mxu0 0
  %1396 = vmatprep.subr.bf16.mxu0 0
  %1397 = vmatpush2.bf16.msra.mxu0 0
  %1398 = vmatprep.subr.bf16.mxu0 0
  %1399 = vmatpush2.bf16.msra.mxu0 0
  %1400 = vmatprep.subr.bf16.mxu0 0
  %1401 = vmatpush2.bf16.msra.mxu0 0
  %1402 = vmatprep.mubr.bf16.mxu0 0
  %1403 = vmatmul.mubr.bf16.gmra.mxu0 %v634
  %v1404 = vpop.f32.mrf.mxu0
  %v1405 = vadd.f32 0.0, %v1404
  %v1406 = vpop.f32.mrf.mxu0
  %v1407 = vpop.f32.mrf.mxu0
  %v1408 = vadd.f32 0.0, %v1407
  %v1409 = vpop.f32.mrf.mxu0
  %1410 = vmatprep.mubr.bf16.mxu0 0
  %1411 = vmatmul.mubr.bf16.gmra.mxu0 %v635
  %v1412 = vpop.f32.mrf.mxu0
  %v1413 = vadd.f32 0.0, %v1412
  %v1414 = vpop.f32.mrf.mxu0
  %v1415 = vpop.f32.mrf.mxu0
  %v1416 = vadd.f32 0.0, %v1415
  %v1417 = vpop.f32.mrf.mxu0
  %1418 = vmatprep.mubr.bf16.mxu0 0
  %1419 = vmatmul.mubr.bf16.gmra.mxu0 %v636
  %v1420 = vpop.f32.mrf.mxu0
  %v1421 = vadd.f32 0.0, %v1420
  %v1422 = vpop.f32.mrf.mxu0
  %v1423 = vpop.f32.mrf.mxu0
  %v1424 = vadd.f32 0.0, %v1423
  %v1425 = vpop.f32.mrf.mxu0
  %1426 = vmatprep.mubr.bf16.mxu0 0
  %1427 = vmatmul.mubr.bf16.gmra.mxu0 %v637
  %v1428 = vpop.f32.mrf.mxu0
  %v1429 = vadd.f32 0.0, %v1428
  %v1430 = vpop.f32.mrf.mxu0
  %v1431 = vpop.f32.mrf.mxu0
  %v1432 = vadd.f32 0.0, %v1431
  %v1433 = vpop.f32.mrf.mxu0
  %1434 = vmatprep.mubr.bf16.mxu0 0
  %1435 = vmatmul.mubr.bf16.gmra.mxu0 %v638
  %v1436 = vpop.f32.mrf.mxu0
  %v1437 = vadd.f32 0.0, %v1436
  %v1438 = vpop.f32.mrf.mxu0
  %v1439 = vpop.f32.mrf.mxu0
  %v1440 = vadd.f32 0.0, %v1439
  %v1441 = vpop.f32.mrf.mxu0
  %1442 = vmatprep.mubr.bf16.mxu0 0
  %1443 = vmatmul.mubr.bf16.gmra.mxu0 %v639
  %v1444 = vpop.f32.mrf.mxu0
  %v1445 = vadd.f32 0.0, %v1444
  %v1446 = vpop.f32.mrf.mxu0
  %v1447 = vpop.f32.mrf.mxu0
  %v1448 = vadd.f32 0.0, %v1447
  %v1449 = vpop.f32.mrf.mxu0
  %1450 = vmatprep.mubr.bf16.mxu0 0
  %1451 = vmatmul.mubr.bf16.gmra.mxu0 %v640
  %v1452 = vpop.f32.mrf.mxu0
  %v1453 = vadd.f32 0.0, %v1452
  %v1454 = vpop.f32.mrf.mxu0
  %v1455 = vpop.f32.mrf.mxu0
  %v1456 = vadd.f32 0.0, %v1455
  %v1457 = vpop.f32.mrf.mxu0
  %1458 = vmatprep.mubr.bf16.mxu0 0
  %1459 = vmatmul.mubr.bf16.gmra.mxu0 %v641
  %v1460 = vpop.f32.mrf.mxu0
  %v1461 = vadd.f32 0.0, %v1460
  %v1462 = vpop.f32.mrf.mxu0
  %v1463 = vpop.f32.mrf.mxu0
  %v1464 = vadd.f32 0.0, %v1463
  %v1465 = vpop.f32.mrf.mxu0
  %1466 = vdwg.mxu0
  %v1467 = vmul.f32 %v1405, %v749
  %v1468 = vmul.f32 %v1408, %v753
  %v1469 = vmul.f32 %v1413, %v757
  %v1470 = vmul.f32 %v1416, %v761
  %v1471 = vmul.f32 %v1421, %v765
  %v1472 = vmul.f32 %v1424, %v769
  %v1473 = vmul.f32 %v1429, %v773
  %v1474 = vmul.f32 %v1432, %v777
  %v1475 = vmul.f32 %v1437, %v781
  %v1476 = vmul.f32 %v1440, %v785
  %v1477 = vmul.f32 %v1445, %v789
  %v1478 = vmul.f32 %v1448, %v793
  %v1479 = vmul.f32 %v1453, %v797
  %v1480 = vmul.f32 %v1456, %v801
  %v1481 = vmul.f32 %v1461, %v805
  %v1482 = vmul.f32 %v1464, %v809
  %v1484 = vlaneseq
  %v1485 = vshrl.u32 %v1484, 7
  %v1486 = vsub.s32 0, %v1485
  %v1487 = vrot.slane %v151, %v1486
  %v1489 = vadd.f32 %v1467, %v1487
  %v1490 = vadd.f32 %v1468, %v1487
  %v1491 = vadd.f32 %v1469, %v1487
  %v1492 = vadd.f32 %v1470, %v1487
  %v1493 = vadd.f32 %v1471, %v1487
  %v1494 = vadd.f32 %v1472, %v1487
  %v1495 = vadd.f32 %v1473, %v1487
  %v1496 = vadd.f32 %v1474, %v1487
  %v1497 = vadd.f32 %v1475, %v1487
  %v1498 = vadd.f32 %v1476, %v1487
  %v1499 = vadd.f32 %v1477, %v1487
  %v1500 = vadd.f32 %v1478, %v1487
  %v1501 = vadd.f32 %v1479, %v1487
  %v1502 = vadd.f32 %v1480, %v1487
  %v1503 = vadd.f32 %v1481, %v1487
  %v1504 = vadd.f32 %v1482, %v1487
  %v1505 = vmax.f32 %v1489, 0.0
  %v1506 = vmax.f32 %v1490, 0.0
  %v1507 = vmax.f32 %v1491, 0.0
  %v1508 = vmax.f32 %v1492, 0.0
  %v1509 = vmax.f32 %v1493, 0.0
  %v1510 = vmax.f32 %v1494, 0.0
  %v1511 = vmax.f32 %v1495, 0.0
  %v1512 = vmax.f32 %v1496, 0.0
  %v1513 = vmax.f32 %v1497, 0.0
  %v1514 = vmax.f32 %v1498, 0.0
  %v1515 = vmax.f32 %v1499, 0.0
  %v1516 = vmax.f32 %v1500, 0.0
  %v1517 = vmax.f32 %v1501, 0.0
  %v1518 = vmax.f32 %v1502, 0.0
  %v1519 = vmax.f32 %v1503, 0.0
  %v1520 = vmax.f32 %v1504, 0.0
  %v1521 = vpack.c.bf16 %v1506, %v1505
  %v1522 = vpack.c.bf16 %v1508, %v1507
  %v1523 = vpack.c.bf16 %v1510, %v1509
  %v1524 = vpack.c.bf16 %v1512, %v1511
  %v1525 = vpack.c.bf16 %v1514, %v1513
  %v1526 = vpack.c.bf16 %v1516, %v1515
  %v1527 = vpack.c.bf16 %v1518, %v1517
  %v1528 = vpack.c.bf16 %v1520, %v1519
  %v1545 = vunpack.c.l.b16 %v117
  %v1546 = vunpack.c.l.b16 %v118
  %v1547 = vunpack.c.l.b16 %v119
  %v1548 = vunpack.c.l.b16 %v120
  %v1549 = vunpack.c.l.b16 %v121
  %v1550 = vunpack.c.l.b16 %v122
  %v1551 = vunpack.c.l.b16 %v123
  %v1552 = vunpack.c.l.b16 %v124
  %v1553 = vunpack.c.l.b16 %v125
  %v1554 = vunpack.c.l.b16 %v126
  %v1555 = vunpack.c.l.b16 %v127
  %v1556 = vunpack.c.l.b16 %v128
  %v1557 = vunpack.c.l.b16 %v129
  %v1558 = vunpack.c.l.b16 %v130
  %v1559 = vunpack.c.l.b16 %v131
  %v1560 = vunpack.c.l.b16 %v132
  %v1561 = vpack.c.b16 %v1546, %v1545
  %v1562 = vpack.c.b16 %v1548, %v1547
  %v1563 = vpack.c.b16 %v1550, %v1549
  %v1564 = vpack.c.b16 %v1552, %v1551
  %v1565 = vpack.c.b16 %v1554, %v1553
  %v1566 = vpack.c.b16 %v1556, %v1555
  %v1567 = vpack.c.b16 %v1558, %v1557
  %v1568 = vpack.c.b16 %v1560, %v1559
  %1577 = vmatprep.subr.bf16.mxu0 0
  %1578 = vmatpush1.bf16.msra.mxu0 %v1568
  %1579 = vmatprep.subr.bf16.mxu0 0
  %1580 = vmatpush1.bf16.msra.mxu0 %v1567
  %1581 = vmatprep.subr.bf16.mxu0 0
  %1582 = vmatpush1.bf16.msra.mxu0 %v1566
  %1583 = vmatprep.subr.bf16.mxu0 0
  %1584 = vmatpush1.bf16.msra.mxu0 %v1565
  %1585 = vmatprep.subr.bf16.mxu0 0
  %1586 = vmatpush1.bf16.msra.mxu0 %v1564
  %1587 = vmatprep.subr.bf16.mxu0 0
  %1588 = vmatpush1.bf16.msra.mxu0 %v1563
  %1589 = vmatprep.subr.bf16.mxu0 0
  %1590 = vmatpush1.bf16.msra.mxu0 %v1562
  %1591 = vmatprep.subr.bf16.mxu0 0
  %1592 = vmatpush1.bf16.msra.mxu0 %v1561
  %1593 = vmatprep.subr.bf16.mxu0 0
  %1594 = vmatpush2.bf16.msra.mxu0 0
  %1595 = vmatprep.subr.bf16.mxu0 0
  %1596 = vmatpush2.bf16.msra.mxu0 0
  %1597 = vmatprep.subr.bf16.mxu0 0
  %1598 = vmatpush2.bf16.msra.mxu0 0
  %1599 = vmatprep.subr.bf16.mxu0 0
  %1600 = vmatpush2.bf16.msra.mxu0 0
  %1601 = vmatprep.subr.bf16.mxu0 0
  %1602 = vmatpush2.bf16.msra.mxu0 0
  %1603 = vmatprep.subr.bf16.mxu0 0
  %1604 = vmatpush2.bf16.msra.mxu0 0
  %1605 = vmatprep.subr.bf16.mxu0 0
  %1606 = vmatpush2.bf16.msra.mxu0 0
  %1607 = vmatprep.subr.bf16.mxu0 0
  %1608 = vmatpush2.bf16.msra.mxu0 0
  %1609 = vmatprep.mubr.bf16.mxu0 0
  %1610 = vmatmul.mubr.bf16.gmra.mxu0 %v1521
  %v1611 = vpop.f32.mrf.mxu0
  %v1612 = vadd.f32 0.0, %v1611
  %v1613 = vpop.f32.mrf.mxu0
  %v1614 = vpop.f32.mrf.mxu0
  %v1615 = vadd.f32 0.0, %v1614
  %v1616 = vpop.f32.mrf.mxu0
  %1617 = vmatprep.mubr.bf16.mxu0 0
  %1618 = vmatmul.mubr.bf16.gmra.mxu0 %v1522
  %v1619 = vpop.f32.mrf.mxu0
  %v1620 = vadd.f32 0.0, %v1619
  %v1621 = vpop.f32.mrf.mxu0
  %v1622 = vpop.f32.mrf.mxu0
  %v1623 = vadd.f32 0.0, %v1622
  %v1624 = vpop.f32.mrf.mxu0
  %1625 = vmatprep.mubr.bf16.mxu0 0
  %1626 = vmatmul.mubr.bf16.gmra.mxu0 %v1523
  %v1627 = vpop.f32.mrf.mxu0
  %v1628 = vadd.f32 0.0, %v1627
  %v1629 = vpop.f32.mrf.mxu0
  %v1630 = vpop.f32.mrf.mxu0
  %v1631 = vadd.f32 0.0, %v1630
  %v1632 = vpop.f32.mrf.mxu0
  %1633 = vmatprep.mubr.bf16.mxu0 0
  %1634 = vmatmul.mubr.bf16.gmra.mxu0 %v1524
  %v1635 = vpop.f32.mrf.mxu0
  %v1636 = vadd.f32 0.0, %v1635
  %v1637 = vpop.f32.mrf.mxu0
  %v1638 = vpop.f32.mrf.mxu0
  %v1639 = vadd.f32 0.0, %v1638
  %v1640 = vpop.f32.mrf.mxu0
  %1641 = vmatprep.mubr.bf16.mxu0 0
  %1642 = vmatmul.mubr.bf16.gmra.mxu0 %v1525
  %v1643 = vpop.f32.mrf.mxu0
  %v1644 = vadd.f32 0.0, %v1643
  %v1645 = vpop.f32.mrf.mxu0
  %v1646 = vpop.f32.mrf.mxu0
  %v1647 = vadd.f32 0.0, %v1646
  %v1648 = vpop.f32.mrf.mxu0
  %1649 = vmatprep.mubr.bf16.mxu0 0
  %1650 = vmatmul.mubr.bf16.gmra.mxu0 %v1526
  %v1651 = vpop.f32.mrf.mxu0
  %v1652 = vadd.f32 0.0, %v1651
  %v1653 = vpop.f32.mrf.mxu0
  %v1654 = vpop.f32.mrf.mxu0
  %v1655 = vadd.f32 0.0, %v1654
  %v1656 = vpop.f32.mrf.mxu0
  %1657 = vmatprep.mubr.bf16.mxu0 0
  %1658 = vmatmul.mubr.bf16.gmra.mxu0 %v1527
  %v1659 = vpop.f32.mrf.mxu0
  %v1660 = vadd.f32 0.0, %v1659
  %v1661 = vpop.f32.mrf.mxu0
  %v1662 = vpop.f32.mrf.mxu0
  %v1663 = vadd.f32 0.0, %v1662
  %v1664 = vpop.f32.mrf.mxu0
  %1665 = vmatprep.mubr.bf16.mxu0 0
  %1666 = vmatmul.mubr.bf16.gmra.mxu0 %v1528
  %v1667 = vpop.f32.mrf.mxu0
  %v1668 = vadd.f32 0.0, %v1667
  %v1669 = vpop.f32.mrf.mxu0
  %v1670 = vpop.f32.mrf.mxu0
  %v1671 = vadd.f32 0.0, %v1670
  %v1672 = vpop.f32.mrf.mxu0
  %1673 = vdwg.mxu0
  %v1674 = vmul.f32 %v1612, %v501
  %v1675 = vmul.f32 %v1615, %v506
  %v1676 = vmul.f32 %v1620, %v511
  %v1677 = vmul.f32 %v1623, %v516
  %v1678 = vmul.f32 %v1628, %v521
  %v1679 = vmul.f32 %v1631, %v526
  %v1680 = vmul.f32 %v1636, %v531
  %v1681 = vmul.f32 %v1639, %v536
  %v1682 = vmul.f32 %v1644, %v541
  %v1683 = vmul.f32 %v1647, %v546
  %v1684 = vmul.f32 %v1652, %v551
  %v1685 = vmul.f32 %v1655, %v556
  %v1686 = vmul.f32 %v1660, %v561
  %v1687 = vmul.f32 %v1663, %v566
  %v1688 = vmul.f32 %v1668, %v571
  %v1689 = vmul.f32 %v1671, %v576
  %v1690 = vpack.c.bf16 %v1675, %v1674
  %v1691 = vpack.c.bf16 %v1677, %v1676
  %v1692 = vpack.c.bf16 %v1679, %v1678
  %v1693 = vpack.c.bf16 %v1681, %v1680
  %v1694 = vpack.c.bf16 %v1683, %v1682
  %v1695 = vpack.c.bf16 %v1685, %v1684
  %v1696 = vpack.c.bf16 %v1687, %v1686
  %v1697 = vpack.c.bf16 %v1689, %v1688
  %1698 = vmatprep.subr.bf16.mxu0 0
  %1699 = vmatpush1.bf16.msra.mxu0 %v1697
  %1700 = vmatprep.subr.bf16.mxu0 0
  %1701 = vmatpush1.bf16.msra.mxu0 %v1696
  %1702 = vmatprep.subr.bf16.mxu0 0
  %1703 = vmatpush1.bf16.msra.mxu0 %v1695
  %1704 = vmatprep.subr.bf16.mxu0 0
  %1705 = vmatpush1.bf16.msra.mxu0 %v1694
  %1706 = vmatprep.subr.bf16.mxu0 0
  %1707 = vmatpush1.bf16.msra.mxu0 %v1693
  %1708 = vmatprep.subr.bf16.mxu0 0
  %1709 = vmatpush1.bf16.msra.mxu0 %v1692
  %1710 = vmatprep.subr.bf16.mxu0 0
  %1711 = vmatpush1.bf16.msra.mxu0 %v1691
  %1712 = vmatprep.subr.bf16.mxu0 0
  %1713 = vmatpush1.bf16.msra.mxu0 %v1690
  %1714 = vmatprep.subr.bf16.mxu0 0
  %1715 = vmatpush2.bf16.msra.mxu0 0
  %1716 = vmatprep.subr.bf16.mxu0 0
  %1717 = vmatpush2.bf16.msra.mxu0 0
  %1718 = vmatprep.subr.bf16.mxu0 0
  %1719 = vmatpush2.bf16.msra.mxu0 0
  %1720 = vmatprep.subr.bf16.mxu0 0
  %1721 = vmatpush2.bf16.msra.mxu0 0
  %1722 = vmatprep.subr.bf16.mxu0 0
  %1723 = vmatpush2.bf16.msra.mxu0 0
  %1724 = vmatprep.subr.bf16.mxu0 0
  %1725 = vmatpush2.bf16.msra.mxu0 0
  %1726 = vmatprep.subr.bf16.mxu0 0
  %1727 = vmatpush2.bf16.msra.mxu0 0
  %1728 = vmatprep.subr.bf16.mxu0 0
  %1729 = vmatpush2.bf16.msra.mxu0 0
  %1730 = vmatprep.mubr.bf16.mxu0 0
  %1731 = vmatmul.mubr.bf16.gmra.mxu0 %v634
  %v1732 = vpop.f32.mrf.mxu0
  %v1733 = vadd.f32 0.0, %v1732
  %v1734 = vpop.f32.mrf.mxu0
  %v1735 = vpop.f32.mrf.mxu0
  %v1736 = vadd.f32 0.0, %v1735
  %v1737 = vpop.f32.mrf.mxu0
  %1738 = vmatprep.mubr.bf16.mxu0 0
  %1739 = vmatmul.mubr.bf16.gmra.mxu0 %v635
  %v1740 = vpop.f32.mrf.mxu0
  %v1741 = vadd.f32 0.0, %v1740
  %v1742 = vpop.f32.mrf.mxu0
  %v1743 = vpop.f32.mrf.mxu0
  %v1744 = vadd.f32 0.0, %v1743
  %v1745 = vpop.f32.mrf.mxu0
  %1746 = vmatprep.mubr.bf16.mxu0 0
  %1747 = vmatmul.mubr.bf16.gmra.mxu0 %v636
  %v1748 = vpop.f32.mrf.mxu0
  %v1749 = vadd.f32 0.0, %v1748
  %v1750 = vpop.f32.mrf.mxu0
  %v1751 = vpop.f32.mrf.mxu0
  %v1752 = vadd.f32 0.0, %v1751
  %v1753 = vpop.f32.mrf.mxu0
  %1754 = vmatprep.mubr.bf16.mxu0 0
  %1755 = vmatmul.mubr.bf16.gmra.mxu0 %v637
  %v1756 = vpop.f32.mrf.mxu0
  %v1757 = vadd.f32 0.0, %v1756
  %v1758 = vpop.f32.mrf.mxu0
  %v1759 = vpop.f32.mrf.mxu0
  %v1760 = vadd.f32 0.0, %v1759
  %v1761 = vpop.f32.mrf.mxu0
  %1762 = vmatprep.mubr.bf16.mxu0 0
  %1763 = vmatmul.mubr.bf16.gmra.mxu0 %v638
  %v1764 = vpop.f32.mrf.mxu0
  %v1765 = vadd.f32 0.0, %v1764
  %v1766 = vpop.f32.mrf.mxu0
  %v1767 = vpop.f32.mrf.mxu0
  %v1768 = vadd.f32 0.0, %v1767
  %v1769 = vpop.f32.mrf.mxu0
  %1770 = vmatprep.mubr.bf16.mxu0 0
  %1771 = vmatmul.mubr.bf16.gmra.mxu0 %v639
  %v1772 = vpop.f32.mrf.mxu0
  %v1773 = vadd.f32 0.0, %v1772
  %v1774 = vpop.f32.mrf.mxu0
  %v1775 = vpop.f32.mrf.mxu0
  %v1776 = vadd.f32 0.0, %v1775
  %v1777 = vpop.f32.mrf.mxu0
  %1778 = vmatprep.mubr.bf16.mxu0 0
  %1779 = vmatmul.mubr.bf16.gmra.mxu0 %v640
  %v1780 = vpop.f32.mrf.mxu0
  %v1781 = vadd.f32 0.0, %v1780
  %v1782 = vpop.f32.mrf.mxu0
  %v1783 = vpop.f32.mrf.mxu0
  %v1784 = vadd.f32 0.0, %v1783
  %v1785 = vpop.f32.mrf.mxu0
  %1786 = vmatprep.mubr.bf16.mxu0 0
  %1787 = vmatmul.mubr.bf16.gmra.mxu0 %v641
  %v1788 = vpop.f32.mrf.mxu0
  %v1789 = vadd.f32 0.0, %v1788
  %v1790 = vpop.f32.mrf.mxu0
  %v1791 = vpop.f32.mrf.mxu0
  %v1792 = vadd.f32 0.0, %v1791
  %v1793 = vpop.f32.mrf.mxu0
  %1794 = vdwg.mxu0
  %v1795 = vmul.f32 %v1733, %v749
  %v1796 = vmul.f32 %v1736, %v753
  %v1797 = vmul.f32 %v1741, %v757
  %v1798 = vmul.f32 %v1744, %v761
  %v1799 = vmul.f32 %v1749, %v765
  %v1800 = vmul.f32 %v1752, %v769
  %v1801 = vmul.f32 %v1757, %v773
  %v1802 = vmul.f32 %v1760, %v777
  %v1803 = vmul.f32 %v1765, %v781
  %v1804 = vmul.f32 %v1768, %v785
  %v1805 = vmul.f32 %v1773, %v789
  %v1806 = vmul.f32 %v1776, %v793
  %v1807 = vmul.f32 %v1781, %v797
  %v1808 = vmul.f32 %v1784, %v801
  %v1809 = vmul.f32 %v1789, %v805
  %v1810 = vmul.f32 %v1792, %v809
  %v1812 = vlaneseq
  %v1813 = vshrl.u32 %v1812, 7
  %v1814 = vsub.s32 0, %v1813
  %v1815 = vrot.slane %v152, %v1814
  %v1817 = vadd.f32 %v1795, %v1815
  %v1818 = vadd.f32 %v1796, %v1815
  %v1819 = vadd.f32 %v1797, %v1815
  %v1820 = vadd.f32 %v1798, %v1815
  %v1821 = vadd.f32 %v1799, %v1815
  %v1822 = vadd.f32 %v1800, %v1815
  %v1823 = vadd.f32 %v1801, %v1815
  %v1824 = vadd.f32 %v1802, %v1815
  %v1825 = vadd.f32 %v1803, %v1815
  %v1826 = vadd.f32 %v1804, %v1815
  %v1827 = vadd.f32 %v1805, %v1815
  %v1828 = vadd.f32 %v1806, %v1815
  %v1829 = vadd.f32 %v1807, %v1815
  %v1830 = vadd.f32 %v1808, %v1815
  %v1831 = vadd.f32 %v1809, %v1815
  %v1832 = vadd.f32 %v1810, %v1815
  %v1833 = vadd.f32 %v1817, %v291
  %v1834 = vadd.f32 %v1818, %v294
  %v1835 = vadd.f32 %v1819, %v299
  %v1836 = vadd.f32 %v1820, %v302
  %v1837 = vadd.f32 %v1821, %v307
  %v1838 = vadd.f32 %v1822, %v310
  %v1839 = vadd.f32 %v1823, %v315
  %v1840 = vadd.f32 %v1824, %v318
  %v1841 = vadd.f32 %v1825, %v323
  %v1842 = vadd.f32 %v1826, %v326
  %v1843 = vadd.f32 %v1827, %v331
  %v1844 = vadd.f32 %v1828, %v334
  %v1845 = vadd.f32 %v1829, %v339
  %v1846 = vadd.f32 %v1830, %v342
  %v1847 = vadd.f32 %v1831, %v347
  %v1848 = vadd.f32 %v1832, %v350
  %1849 = vst [vmem:[%s5] sm:$0xff] %v1833
  %1850 = vst [vmem:[%s5 + $0x8] sm:$0xff] %v1834
  %1851 = vst [vmem:[%s5 + $0x10] sm:$0xff] %v1835
  %1852 = vst [vmem:[%s5 + $0x18] sm:$0xff] %v1836
  %1853 = vst [vmem:[%s5 + $0x20] sm:$0xff] %v1837
  %1854 = vst [vmem:[%s5 + $0x28] sm:$0xff] %v1838
  %1855 = vst [vmem:[%s5 + $0x30] sm:$0xff] %v1839
  %1856 = vst [vmem:[%s5 + $0x38] sm:$0xff] %v1840
  %1857 = vst [vmem:[%s5 + $0x40] sm:$0xff] %v1841
  %1858 = vst [vmem:[%s5 + $0x48] sm:$0xff] %v1842
  %1859 = vst [vmem:[%s5 + $0x50] sm:$0xff] %v1843
  %1860 = vst [vmem:[%s5 + $0x58] sm:$0xff] %v1844
  %1861 = vst [vmem:[%s5 + $0x60] sm:$0xff] %v1845
  %1862 = vst [vmem:[%s5 + $0x68] sm:$0xff] %v1846
  %1863 = vst [vmem:[%s5 + $0x70] sm:$0xff] %v1847
  %1864 = vst [vmem:[%s5 + $0x78] sm:$0xff] %v1848
  // Predicated region
  $region22: #{gcn_3_layer_edge_weight.1} parent=0 // pred_check
    _
  $region23: #{gcn_3_layer_edge_weight.1} parent=0 // pred_check_branch
    %1866 = sbr.rel (0) target = $region25
  $region24: #{gcn_3_layer_edge_weight.1} parent=0 // pred_region
    _
  $region25: #{gcn_3_layer_edge_weight.1} parent=0 // pred_fallthru
    _
  // Predicated region
  $region26: #{gcn_3_layer_edge_weight.1} parent=0 // pred_check
    _
  $region27: #{gcn_3_layer_edge_weight.1} parent=0 // pred_check_branch
    %1868 = sbr.rel (0) target = $region29
  $region28: #{gcn_3_layer_edge_weight.1} parent=0 // pred_region
    _
  $region29: #{gcn_3_layer_edge_weight.1} parent=0 // pred_fallthru
    _

</llo_original>
